<compile_context>
chip_gen: v6e
topology: v6e:2x2x1
jax: 0.10.0
libtpu: 0.0.40
codegen_flags: <defaults>
</compile_context>

<pallas_src>
import functools

import jax
import jax.numpy as jnp
import numpy as np
from jax.experimental import pallas as pl
from jax.experimental.pallas import tpu as pltpu


def _rpad8(n):
    return -(-n // 8) * 8


def _critic_kernel(hist_ref, obsact_ref, len_ref, gate_ref, mlp_ref, out_ref,
                   *, T, dims, offs):
    Do_p = dims["Do_p"]
    DoDa_p = dims["DoDa_p"]
    H1, H, H2, Hc, Hp = dims["H1"], dims["H"], dims["H2"], dims["Hc"], dims["Hp"]
    TB = hist_ref.shape[0]
    Bp = TB // T

    # ---- mem_pre_lstm: Linear + ReLU over every (t, b) row at once ----
    w_pre = mlp_ref[offs["w_pre"]:offs["w_pre"] + Do_p, 0:H1]        # (Do_p, H1)
    b_pre = mlp_ref[offs["b_pre"]:offs["b_pre"] + 1, 0:H1]           # (1, H1)
    x = jnp.maximum(
        jnp.dot(hist_ref[...], w_pre, preferred_element_type=jnp.float32) + b_pre,
        0.0)                                                         # (T*Bp, H1)

    # ---- input-side LSTM gate contribution hoisted out of the recurrence ----
    w_ih = gate_ref[offs["w_ih"]:offs["w_ih"] + H1, :]               # (H1, 4H)
    w_hh = gate_ref[offs["w_hh"]:offs["w_hh"] + H, :]                # (H, 4H)
    b_g = gate_ref[offs["b_g"]:offs["b_g"] + 1, :]                   # (1, 4H) = b_ih+b_hh
    gates_x = jnp.dot(x, w_ih, preferred_element_type=jnp.float32) + b_g

    # torch.gather index: replace len==0 by 1 (and clamp len>T), minus 1.
    idx_v = jnp.clip(len_ref[...], 1, T) - 1                         # (Bp, 1) int32

    # ---- single-layer LSTM, h0 = c0 = 0, torch gate order (i, f, g, o).
    #      State lives in vregs; loop fully unrolled (T static & small). ----
    h = jnp.zeros((Bp, H), jnp.float32)
    c = jnp.zeros((Bp, H), jnp.float32)
    g = jnp.zeros((Bp, H), jnp.float32)   # gathered hidden state

    for t in range(T):
        gates = (gates_x[t * Bp:(t + 1) * Bp]
                 + jnp.dot(h, w_hh, preferred_element_type=jnp.float32))  # (Bp, 4H)
        sig = jax.nn.sigmoid(gates)       # one EUP pass over the full 4H vreg
        tah = jnp.tanh(gates)             # one EUP pass over the full 4H vreg
        i_g = sig[:, 0:H]
        f_g = sig[:, H:2 * H]
        o_g = sig[:, 3 * H:4 * H]
        g_g = tah[:, 2 * H:3 * H]
        c = f_g * c + i_g * g_g
        h = o_g * jnp.tanh(c)
        g = jnp.where(idx_v == t, h, g)   # one-hot gather over the time loop

    # ---- mem_after_lstm on the gathered hidden state (128-lane output so the
    #      final slab store is unmasked/lane-dense) ----
    w_after = mlp_ref[offs["w_after"]:offs["w_after"] + H, :]        # (H, 128)
    b_after = mlp_ref[offs["b_after"]:offs["b_after"] + 1, :]        # (1, 128)
    hist_full = jnp.maximum(
        jnp.dot(g, w_after, preferred_element_type=jnp.float32) + b_after, 0.0)
    hist_out = hist_full[:, 0:H2]                                    # (Bp, H2)

    # ---- cur_feature on cat(obs, act) (packed side-by-side in lanes) ----
    w_cur = mlp_ref[offs["w_cur"]:offs["w_cur"] + DoDa_p, 0:Hc]
    b_cur = mlp_ref[offs["b_cur"]:offs["b_cur"] + 1, 0:Hc]
    cur = jnp.maximum(
        jnp.dot(obsact_ref[...], w_cur, preferred_element_type=jnp.float32) + b_cur,
        0.0)                                                         # (Bp, Hc)

    # ---- post_combined: concat folded into a split matmul (no lane concat) ----
    w_p1h = mlp_ref[offs["w_p1h"]:offs["w_p1h"] + H2, 0:Hp]
    w_p1c = mlp_ref[offs["w_p1c"]:offs["w_p1c"] + Hc, 0:Hp]
    b_p1 = mlp_ref[offs["b_p1"]:offs["b_p1"] + 1, 0:Hp]
    p1 = jnp.maximum(
        jnp.dot(hist_out, w_p1h, preferred_element_type=jnp.float32)
        + jnp.dot(cur, w_p1c, preferred_element_type=jnp.float32)
        + b_p1, 0.0)                                                 # (Bp, Hp)

    # Final head: 1-lane matmul done as VPU multiply + reduce.
    w_p2 = mlp_ref[offs["w_p2"]:offs["w_p2"] + 1, 0:Hp]              # (1, Hp)
    b_p2 = mlp_ref[offs["b_p2"]:offs["b_p2"] + 1, 0:1]               # (1, 1)
    q = jnp.sum(p1 * w_p2, axis=-1, keepdims=True) + b_p2            # (Bp, 1)

    # Single lane-dense output slab: lanes [0:H2) = hist_out, lanes >= H2 = q.
    lane = jax.lax.broadcasted_iota(jnp.int32, out_ref.shape, 1)
    out_ref[...] = jnp.where(lane < H2, hist_full,
                             jnp.broadcast_to(q, out_ref.shape))


def pack_params(params):
    """One-time packing (do this at init, not per forward call):
    fold b_ih + b_hh and concatenate all weights/biases into two lane-dense
    f32 slabs so the kernel takes 2 weight DMAs instead of 15."""
    f32 = jnp.float32
    Do, H1 = params["w_pre"].shape
    H = params["w_hh"].shape[0]
    H2 = params["w_after"].shape[1]
    DoDa, Hc = params["w_cur"].shape
    Da = DoDa - Do
    Hp = params["w_p1h"].shape[1]
    LANES = 128
    assert 4 * H <= LANES and max(H1, Hc, Hp) <= LANES and H2 < LANES

    # gate slab: [w_ih ; w_hh ; b_ih + b_hh], width 4H, 8-row aligned segments.
    o_ih, o_hh = 0, _rpad8(H1)
    o_bg = o_hh + _rpad8(H)
    gate = jnp.zeros((o_bg + 8, 4 * H), f32)
    gate = gate.at[o_ih:o_ih + H1].set(params["w_ih"].astype(f32))
    gate = gate.at[o_hh:o_hh + H].set(params["w_hh"].astype(f32))
    gate = gate.at[o_bg].set((params["b_ih"] + params["b_hh"]).astype(f32).reshape(-1))

    # mlp slab: every remaining weight / bias as an 8-row-aligned segment of a
    # single (rows, 128) slab (zero padded in rows and lanes).
    segs = [
        ("w_pre", params["w_pre"]), ("b_pre", params["b_pre"]),
        ("w_after", params["w_after"]), ("b_after", params["b_after"]),
        ("w_cur", params["w_cur"]), ("b_cur", params["b_cur"]),
        ("w_p1h", params["w_p1h"]), ("w_p1c", params["w_p1c"]),
        ("b_p1", params["b_p1"]),
        ("w_p2", params["w_p2"]), ("b_p2", params["b_p2"]),
    ]
    offs = {"w_ih": o_ih, "w_hh": o_hh, "b_g": o_bg}
    total = 0
    for name, m in segs:
        offs[name] = total
        total += _rpad8(m.shape[0])
    mlp = jnp.zeros((total, LANES), f32)
    for name, m in segs:
        mlp = mlp.at[offs[name]:offs[name] + m.shape[0], :m.shape[1]].set(m.astype(f32))

    dims = dict(Do=Do, Da=Da, Do_p=_rpad8(Do), DoDa=DoDa, DoDa_p=_rpad8(DoDa),
                H1=H1, H=H, H2=H2, Hc=Hc, Hp=Hp, LANES=LANES)
    return {"gate": gate, "mlp": mlp, "offs": offs, "dims": dims}


def mlp_critic_forward(packed, obs, act, hist_obs, hist_act, hist_seg_len):
    del hist_act  # hist_with_past_act=False: history branch only sees hist_obs
    d, offs = packed["dims"], packed["offs"]
    B, T, Do = hist_obs.shape
    assert Do == d["Do"]
    Bp = _rpad8(B)                     # pad batch to the f32 sublane width
    Do_p, DoDa_p, Da = d["Do_p"], d["DoDa_p"], d["Da"]
    H, H1, H2, Hc, Hp, LANES = d["H"], d["H1"], d["H2"], d["Hc"], d["Hp"], d["LANES"]
    f32 = jnp.float32

    # Glue (XLA fuses each into a single copy): batch-pad + time-major flatten
    # so every per-step slice on the serial LSTM chain is (8,128)-tile aligned;
    # obs/act packed side-by-side in lanes (no concat HLO + matching w_cur rows).
    hist_p = jnp.zeros((T, Bp, Do_p), f32).at[:, :B, :Do].set(
        jnp.transpose(hist_obs.astype(f32), (1, 0, 2)))
    hist_flat = hist_p.reshape(T * Bp, Do_p)
    obsact = (jnp.zeros((Bp, DoDa_p), f32)
              .at[:B, :Do].set(obs.astype(f32))
              .at[:B, Do:Do + Da].set(act.astype(f32)))
    seg_len = jnp.ones((Bp, 1), jnp.int32).at[:B, 0].set(hist_seg_len.astype(jnp.int32))

    flops = int(2 * T * Bp * (Do_p * H1 + H1 * 4 * H + H * 4 * H)
                + 2 * Bp * (H * LANES + DoDa_p * Hc + H2 * Hp + Hc * Hp + Hp))
    transcendentals = int(T * Bp * (2 * 4 * H + H))
    bytes_accessed = int(sum(a.size * a.dtype.itemsize for a in
                             (hist_flat, obsact, seg_len, packed["gate"], packed["mlp"]))
                         + Bp * LANES * 4)

    kernel = functools.partial(_critic_kernel, T=T, dims=d, offs=offs)
    vmem = pl.BlockSpec(memory_space=pltpu.MemorySpace.VMEM)
    # Gridless single-core call: at these toy sizes a batch grid is pure
    # overhead; at training batch sizes add grid=(cdiv(B, B_TILE),) with
    # dimension_semantics=("parallel",) for v7x megacore (size B_TILE for the
    # 64 MiB v7x VMEM, not v6e's 128 MiB).
    out = pl.pallas_call(
        kernel,
        out_shape=jax.ShapeDtypeStruct((Bp, LANES), f32),
        in_specs=[vmem] * 5,
        out_specs=vmem,
        cost_estimate=pl.CostEstimate(flops=flops,
                                      transcendentals=transcendentals,
                                      bytes_accessed=bytes_accessed),
    )(hist_flat, obsact, seg_len, packed["gate"], packed["mlp"])

    # lanes [0:H2) hold extracted_memory; every lane >= H2 holds q.
    return out[:B, H2], out[:B, :H2]


def reference_forward(params, obs, act, hist_obs, hist_act, hist_seg_len):
    """Pure-JAX reference mirroring the PyTorch forward."""
    del hist_act
    B, T, _ = hist_obs.shape
    tmp_len = jnp.clip(hist_seg_len.astype(jnp.int32), 1, T)
    x = jnp.maximum(hist_obs @ params["w_pre"] + params["b_pre"], 0.0)
    H = params["w_hh"].shape[0]

    def step(carry, x_t):
        h, c = carry
        gates = (x_t @ params["w_ih"] + params["b_ih"]
                 + h @ params["w_hh"] + params["b_hh"])
        i = jax.nn.sigmoid(gates[:, :H])
        f = jax.nn.sigmoid(gates[:, H:2 * H])
        g = jnp.tanh(gates[:, 2 * H:3 * H])
        o = jax.nn.sigmoid(gates[:, 3 * H:])
        c = f * c + i * g
        h = o * jnp.tanh(c)
        return (h, c), h

    init = (jnp.zeros((B, H), jnp.float32), jnp.zeros((B, H), jnp.float32))
    _, hs = jax.lax.scan(step, init, jnp.transpose(x, (1, 0, 2)))
    hs = jnp.transpose(hs, (1, 0, 2))                                  # (B, T, H)
    x = jnp.maximum(hs @ params["w_after"] + params["b_after"], 0.0)
    idx = (tmp_len - 1)[:, None, None]
    hist_out = jnp.take_along_axis(x, idx, axis=1)[:, 0, :]
    cur = jnp.maximum(jnp.concatenate([obs, act], -1) @ params["w_cur"]
                      + params["b_cur"], 0.0)
    w_p1 = jnp.concatenate([params["w_p1h"], params["w_p1c"]], axis=0)
    comb = jnp.concatenate([hist_out, cur], axis=-1)
    p1 = jnp.maximum(comb @ w_p1 + params["b_p1"], 0.0)
    q = p1 @ params["w_p2"].T + params["b_p2"]
    return jnp.squeeze(q, -1), hist_out


def init_params(key, obs_dim, act_dim, H1, H, H2, Hc, Hp):
    """Deterministic init, torch-style U(-1/sqrt(fan_in), 1/sqrt(fan_in)).
    Weights stored transposed (in, out) so x @ W == torch's x @ W.T."""
    ks = jax.random.split(key, 18)

    def u(k, shape, fan_in):
        b = 1.0 / np.sqrt(fan_in)
        return jax.random.uniform(k, shape, jnp.float32, -b, b)

    return {
        "w_pre":   u(ks[0], (obs_dim, H1), obs_dim),
        "b_pre":   u(ks[1], (1, H1), obs_dim),
        "w_ih":    u(ks[2], (H1, 4 * H), H),
        "b_ih":    u(ks[3], (1, 4 * H), H),
        "w_hh":    u(ks[4], (H, 4 * H), H),
        "b_hh":    u(ks[5], (1, 4 * H), H),
        "w_after": u(ks[6], (H, H2), H),
        "b_after": u(ks[7], (1, H2), H),
        "w_cur":   u(ks[8], (obs_dim + act_dim, Hc), obs_dim + act_dim),
        "b_cur":   u(ks[9], (1, Hc), obs_dim + act_dim),
        "w_p1h":   u(ks[10], (H2, Hp), H2 + Hc),
        "w_p1c":   u(ks[11], (Hc, Hp), H2 + Hc),
        "b_p1":    u(ks[12], (1, Hp), H2 + Hc),
        "w_p2":    u(ks[13], (1, Hp), Hp),     # torch layout (out=1, in=Hp)
        "b_p2":    u(ks[14], (1, 1), Hp),
    }


if __name__ == "__main__":
    key = jax.random.PRNGKey(0)
    B, T = 2, 8
    obs_dim, act_dim = 11, 3
    H1 = H = H2 = Hc = Hp = 32   # mem_pre_lstm / lstm / after_lstm / cur / post hidden

    kp, k1, k2, k3, k4 = jax.random.split(key, 5)
    params = init_params(kp, obs_dim, act_dim, H1, H, H2, Hc, Hp)
    packed = pack_params(params)       # one-time packing, outside the forward

    obs = jax.random.normal(k1, (B, obs_dim), jnp.float32)
    act = jax.random.normal(k2, (B, act_dim), jnp.float32)
    hist_obs = jax.random.normal(k3, (B, T, obs_dim), jnp.float32)
    hist_act = jax.random.normal(k4, (B, T, act_dim), jnp.float32)
    hist_seg_len = jnp.array([5, 0], dtype=jnp.int32)   # exercises the zero-clamp path

    q, mem = mlp_critic_forward(packed, obs, act, hist_obs, hist_act, hist_seg_len)
    q = jax.block_until_ready(q)
    mem = jax.block_until_ready(mem)

    q_ref, mem_ref = reference_forward(params, obs, act, hist_obs, hist_act, hist_seg_len)
    np.testing.assert_allclose(np.asarray(q), np.asarray(q_ref), rtol=1e-4, atol=1e-4)
    np.testing.assert_allclose(np.asarray(mem), np.asarray(mem_ref), rtol=1e-4, atol=1e-4)

    print("KERNEL_OK")
</pallas_src>

<mosaic_0001>
module attributes {stable_mosaic.version = 11 : i64} {
  func.func @_critic_kernel(%arg0: memref<64x16xf32, #tpu.memory_space<vmem>>, %arg1: memref<8x16xf32, #tpu.memory_space<vmem>>, %arg2: memref<8x1xi32, #tpu.memory_space<vmem>>, %arg3: memref<72x128xf32, #tpu.memory_space<vmem>>, %arg4: memref<176x128xf32, #tpu.memory_space<vmem>>, %arg5: memref<8x128xf32, #tpu.memory_space<vmem>>) attributes {dimension_semantics = [], scalar_prefetch = 0 : i64, scratch_operands = 0 : i64, tpu.core_type = #tpu.core_type<tc>} {
    %c0 = arith.constant 0 : index
    %c0_0 = arith.constant 0 : index
    %0 = vector.load %arg4[%c0, %c0_0] : memref<176x128xf32, #tpu.memory_space<vmem>>, vector<16x32xf32>
    %c16 = arith.constant 16 : index
    %c0_1 = arith.constant 0 : index
    %1 = vector.load %arg4[%c16, %c0_1] : memref<176x128xf32, #tpu.memory_space<vmem>>, vector<1x32xf32>
    %c0_2 = arith.constant 0 : index
    %c0_3 = arith.constant 0 : index
    %2 = vector.load %arg0[%c0_2, %c0_3] : memref<64x16xf32, #tpu.memory_space<vmem>>, vector<64x16xf32>
    %cst = arith.constant dense<0.000000e+00> : vector<64x32xf32>
    %3 = tpu.matmul %2, %0, %cst {dimension_numbers = #tpu.dot_dimension_numbers<[1], [0], [0], [1], [0, 0, 1, 1], [], []>} : vector<64x16xf32>, vector<16x32xf32>, vector<64x32xf32> -> vector<64x32xf32>
    %4 = vector.broadcast %1 : vector<1x32xf32> to vector<64x32xf32>
    %5 = arith.addf %3, %4 : vector<64x32xf32>
    %cst_4 = arith.constant 0.000000e+00 : f32
    %6 = vector.broadcast %cst_4 : f32 to vector<64x32xf32>
    %7 = arith.maximumf %5, %6 : vector<64x32xf32>
    %c0_5 = arith.constant 0 : index
    %c0_6 = arith.constant 0 : index
    %8 = vector.load %arg3[%c0_5, %c0_6] : memref<72x128xf32, #tpu.memory_space<vmem>>, vector<32x128xf32>
    %c32 = arith.constant 32 : index
    %c0_7 = arith.constant 0 : index
    %9 = vector.load %arg3[%c32, %c0_7] : memref<72x128xf32, #tpu.memory_space<vmem>>, vector<32x128xf32>
    %c64 = arith.constant 64 : index
    %c0_8 = arith.constant 0 : index
    %10 = vector.load %arg3[%c64, %c0_8] : memref<72x128xf32, #tpu.memory_space<vmem>>, vector<1x128xf32>
    %cst_9 = arith.constant dense<0.000000e+00> : vector<64x128xf32>
    %11 = tpu.matmul %7, %8, %cst_9 {dimension_numbers = #tpu.dot_dimension_numbers<[1], [0], [0], [1], [0, 0, 1, 1], [], []>} : vector<64x32xf32>, vector<32x128xf32>, vector<64x128xf32> -> vector<64x128xf32>
    %12 = vector.broadcast %10 : vector<1x128xf32> to vector<64x128xf32>
    %13 = arith.addf %11, %12 : vector<64x128xf32>
    %c0_10 = arith.constant 0 : index
    %c0_11 = arith.constant 0 : index
    %14 = vector.load %arg2[%c0_10, %c0_11] : memref<8x1xi32, #tpu.memory_space<vmem>>, vector<8x1xi32>
    %c1_i32 = arith.constant 1 : i32
    %c8_i32 = arith.constant 8 : i32
    %15 = vector.broadcast %c1_i32 : i32 to vector<8x1xi32>
    %16 = arith.maxsi %15, %14 : vector<8x1xi32>
    %17 = vector.broadcast %c8_i32 : i32 to vector<8x1xi32>
    %18 = arith.minsi %17, %16 : vector<8x1xi32>
    %c1_i32_12 = arith.constant 1 : i32
    %19 = vector.broadcast %c1_i32_12 : i32 to vector<8x1xi32>
    %20 = arith.subi %18, %19 : vector<8x1xi32>
    %cst_13 = arith.constant 0.000000e+00 : f32
    %21 = vector.broadcast %cst_13 : f32 to vector<8x32xf32>
    %cst_14 = arith.constant 0.000000e+00 : f32
    %22 = vector.broadcast %cst_14 : f32 to vector<8x32xf32>
    %cst_15 = arith.constant 0.000000e+00 : f32
    %23 = vector.broadcast %cst_15 : f32 to vector<8x32xf32>
    %24 = vector.extract_strided_slice %13 {offsets = [0, 0], sizes = [8, 128], strides = [1, 1]} : vector<64x128xf32> to vector<8x128xf32>
    %cst_16 = arith.constant dense<0.000000e+00> : vector<8x128xf32>
    %25 = tpu.matmul %21, %9, %cst_16 {dimension_numbers = #tpu.dot_dimension_numbers<[1], [0], [0], [1], [0, 0, 1, 1], [], []>} : vector<8x32xf32>, vector<32x128xf32>, vector<8x128xf32> -> vector<8x128xf32>
    %26 = arith.addf %24, %25 : vector<8x128xf32>
    %27 = arith.negf %26 : vector<8x128xf32>
    %28 = math.exp %27 : vector<8x128xf32>
    %cst_17 = arith.constant 1.000000e+00 : f32
    %29 = vector.broadcast %cst_17 : f32 to vector<8x128xf32>
    %30 = arith.addf %29, %28 : vector<8x128xf32>
    %31 = arith.divf %29, %30 : vector<8x128xf32>
    %32 = math.tanh %26 : vector<8x128xf32>
    %33 = vector.extract_strided_slice %31 {offsets = [0, 0], sizes = [8, 32], strides = [1, 1]} : vector<8x128xf32> to vector<8x32xf32>
    %34 = vector.extract_strided_slice %31 {offsets = [0, 32], sizes = [8, 32], strides = [1, 1]} : vector<8x128xf32> to vector<8x32xf32>
    %35 = vector.extract_strided_slice %31 {offsets = [0, 96], sizes = [8, 32], strides = [1, 1]} : vector<8x128xf32> to vector<8x32xf32>
    %36 = vector.extract_strided_slice %32 {offsets = [0, 64], sizes = [8, 32], strides = [1, 1]} : vector<8x128xf32> to vector<8x32xf32>
    %37 = arith.mulf %34, %22 : vector<8x32xf32>
    %38 = arith.mulf %33, %36 : vector<8x32xf32>
    %39 = arith.addf %37, %38 : vector<8x32xf32>
    %40 = math.tanh %39 : vector<8x32xf32>
    %41 = arith.mulf %35, %40 : vector<8x32xf32>
    %c0_i32 = arith.constant 0 : i32
    %42 = vector.broadcast %c0_i32 : i32 to vector<8x1xi32>
    %43 = arith.cmpi eq, %20, %42 : vector<8x1xi32>
    %44 = vector.shape_cast %43 : vector<8x1xi1> to vector<8x1xi1>
    %45 = vector.broadcast %44 : vector<8x1xi1> to vector<8x32xi1>
    %46 = arith.select %45, %41, %23 : vector<8x32xi1>, vector<8x32xf32>
    %47 = vector.extract_strided_slice %13 {offsets = [8, 0], sizes = [8, 128], strides = [1, 1]} : vector<64x128xf32> to vector<8x128xf32>
    %cst_18 = arith.constant dense<0.000000e+00> : vector<8x128xf32>
    %48 = tpu.matmul %41, %9, %cst_18 {dimension_numbers = #tpu.dot_dimension_numbers<[1], [0], [0], [1], [0, 0, 1, 1], [], []>} : vector<8x32xf32>, vector<32x128xf32>, vector<8x128xf32> -> vector<8x128xf32>
    %49 = arith.addf %47, %48 : vector<8x128xf32>
    %50 = arith.negf %49 : vector<8x128xf32>
    %51 = math.exp %50 : vector<8x128xf32>
    %cst_19 = arith.constant 1.000000e+00 : f32
    %52 = vector.broadcast %cst_19 : f32 to vector<8x128xf32>
    %53 = arith.addf %52, %51 : vector<8x128xf32>
    %54 = arith.divf %52, %53 : vector<8x128xf32>
    %55 = math.tanh %49 : vector<8x128xf32>
    %56 = vector.extract_strided_slice %54 {offsets = [0, 0], sizes = [8, 32], strides = [1, 1]} : vector<8x128xf32> to vector<8x32xf32>
    %57 = vector.extract_strided_slice %54 {offsets = [0, 32], sizes = [8, 32], strides = [1, 1]} : vector<8x128xf32> to vector<8x32xf32>
    %58 = vector.extract_strided_slice %54 {offsets = [0, 96], sizes = [8, 32], strides = [1, 1]} : vector<8x128xf32> to vector<8x32xf32>
    %59 = vector.extract_strided_slice %55 {offsets = [0, 64], sizes = [8, 32], strides = [1, 1]} : vector<8x128xf32> to vector<8x32xf32>
    %60 = arith.mulf %57, %39 : vector<8x32xf32>
    %61 = arith.mulf %56, %59 : vector<8x32xf32>
    %62 = arith.addf %60, %61 : vector<8x32xf32>
    %63 = math.tanh %62 : vector<8x32xf32>
    %64 = arith.mulf %58, %63 : vector<8x32xf32>
    %c1_i32_20 = arith.constant 1 : i32
    %65 = vector.broadcast %c1_i32_20 : i32 to vector<8x1xi32>
    %66 = arith.cmpi eq, %20, %65 : vector<8x1xi32>
    %67 = vector.shape_cast %66 : vector<8x1xi1> to vector<8x1xi1>
    %68 = vector.broadcast %67 : vector<8x1xi1> to vector<8x32xi1>
    %69 = arith.select %68, %64, %46 : vector<8x32xi1>, vector<8x32xf32>
    %70 = vector.extract_strided_slice %13 {offsets = [16, 0], sizes = [8, 128], strides = [1, 1]} : vector<64x128xf32> to vector<8x128xf32>
    %cst_21 = arith.constant dense<0.000000e+00> : vector<8x128xf32>
    %71 = tpu.matmul %64, %9, %cst_21 {dimension_numbers = #tpu.dot_dimension_numbers<[1], [0], [0], [1], [0, 0, 1, 1], [], []>} : vector<8x32xf32>, vector<32x128xf32>, vector<8x128xf32> -> vector<8x128xf32>
    %72 = arith.addf %70, %71 : vector<8x128xf32>
    %73 = arith.negf %72 : vector<8x128xf32>
    %74 = math.exp %73 : vector<8x128xf32>
    %cst_22 = arith.constant 1.000000e+00 : f32
    %75 = vector.broadcast %cst_22 : f32 to vector<8x128xf32>
    %76 = arith.addf %75, %74 : vector<8x128xf32>
    %77 = arith.divf %75, %76 : vector<8x128xf32>
    %78 = math.tanh %72 : vector<8x128xf32>
    %79 = vector.extract_strided_slice %77 {offsets = [0, 0], sizes = [8, 32], strides = [1, 1]} : vector<8x128xf32> to vector<8x32xf32>
    %80 = vector.extract_strided_slice %77 {offsets = [0, 32], sizes = [8, 32], strides = [1, 1]} : vector<8x128xf32> to vector<8x32xf32>
    %81 = vector.extract_strided_slice %77 {offsets = [0, 96], sizes = [8, 32], strides = [1, 1]} : vector<8x128xf32> to vector<8x32xf32>
    %82 = vector.extract_strided_slice %78 {offsets = [0, 64], sizes = [8, 32], strides = [1, 1]} : vector<8x128xf32> to vector<8x32xf32>
    %83 = arith.mulf %80, %62 : vector<8x32xf32>
    %84 = arith.mulf %79, %82 : vector<8x32xf32>
    %85 = arith.addf %83, %84 : vector<8x32xf32>
    %86 = math.tanh %85 : vector<8x32xf32>
    %87 = arith.mulf %81, %86 : vector<8x32xf32>
    %c2_i32 = arith.constant 2 : i32
    %88 = vector.broadcast %c2_i32 : i32 to vector<8x1xi32>
    %89 = arith.cmpi eq, %20, %88 : vector<8x1xi32>
    %90 = vector.shape_cast %89 : vector<8x1xi1> to vector<8x1xi1>
    %91 = vector.broadcast %90 : vector<8x1xi1> to vector<8x32xi1>
    %92 = arith.select %91, %87, %69 : vector<8x32xi1>, vector<8x32xf32>
    %93 = vector.extract_strided_slice %13 {offsets = [24, 0], sizes = [8, 128], strides = [1, 1]} : vector<64x128xf32> to vector<8x128xf32>
    %cst_23 = arith.constant dense<0.000000e+00> : vector<8x128xf32>
    %94 = tpu.matmul %87, %9, %cst_23 {dimension_numbers = #tpu.dot_dimension_numbers<[1], [0], [0], [1], [0, 0, 1, 1], [], []>} : vector<8x32xf32>, vector<32x128xf32>, vector<8x128xf32> -> vector<8x128xf32>
    %95 = arith.addf %93, %94 : vector<8x128xf32>
    %96 = arith.negf %95 : vector<8x128xf32>
    %97 = math.exp %96 : vector<8x128xf32>
    %cst_24 = arith.constant 1.000000e+00 : f32
    %98 = vector.broadcast %cst_24 : f32 to vector<8x128xf32>
    %99 = arith.addf %98, %97 : vector<8x128xf32>
    %100 = arith.divf %98, %99 : vector<8x128xf32>
    %101 = math.tanh %95 : vector<8x128xf32>
    %102 = vector.extract_strided_slice %100 {offsets = [0, 0], sizes = [8, 32], strides = [1, 1]} : vector<8x128xf32> to vector<8x32xf32>
    %103 = vector.extract_strided_slice %100 {offsets = [0, 32], sizes = [8, 32], strides = [1, 1]} : vector<8x128xf32> to vector<8x32xf32>
    %104 = vector.extract_strided_slice %100 {offsets = [0, 96], sizes = [8, 32], strides = [1, 1]} : vector<8x128xf32> to vector<8x32xf32>
    %105 = vector.extract_strided_slice %101 {offsets = [0, 64], sizes = [8, 32], strides = [1, 1]} : vector<8x128xf32> to vector<8x32xf32>
    %106 = arith.mulf %103, %85 : vector<8x32xf32>
    %107 = arith.mulf %102, %105 : vector<8x32xf32>
    %108 = arith.addf %106, %107 : vector<8x32xf32>
    %109 = math.tanh %108 : vector<8x32xf32>
    %110 = arith.mulf %104, %109 : vector<8x32xf32>
    %c3_i32 = arith.constant 3 : i32
    %111 = vector.broadcast %c3_i32 : i32 to vector<8x1xi32>
    %112 = arith.cmpi eq, %20, %111 : vector<8x1xi32>
    %113 = vector.shape_cast %112 : vector<8x1xi1> to vector<8x1xi1>
    %114 = vector.broadcast %113 : vector<8x1xi1> to vector<8x32xi1>
    %115 = arith.select %114, %110, %92 : vector<8x32xi1>, vector<8x32xf32>
    %116 = vector.extract_strided_slice %13 {offsets = [32, 0], sizes = [8, 128], strides = [1, 1]} : vector<64x128xf32> to vector<8x128xf32>
    %cst_25 = arith.constant dense<0.000000e+00> : vector<8x128xf32>
    %117 = tpu.matmul %110, %9, %cst_25 {dimension_numbers = #tpu.dot_dimension_numbers<[1], [0], [0], [1], [0, 0, 1, 1], [], []>} : vector<8x32xf32>, vector<32x128xf32>, vector<8x128xf32> -> vector<8x128xf32>
    %118 = arith.addf %116, %117 : vector<8x128xf32>
    %119 = arith.negf %118 : vector<8x128xf32>
    %120 = math.exp %119 : vector<8x128xf32>
    %cst_26 = arith.constant 1.000000e+00 : f32
    %121 = vector.broadcast %cst_26 : f32 to vector<8x128xf32>
    %122 = arith.addf %121, %120 : vector<8x128xf32>
    %123 = arith.divf %121, %122 : vector<8x128xf32>
    %124 = math.tanh %118 : vector<8x128xf32>
    %125 = vector.extract_strided_slice %123 {offsets = [0, 0], sizes = [8, 32], strides = [1, 1]} : vector<8x128xf32> to vector<8x32xf32>
    %126 = vector.extract_strided_slice %123 {offsets = [0, 32], sizes = [8, 32], strides = [1, 1]} : vector<8x128xf32> to vector<8x32xf32>
    %127 = vector.extract_strided_slice %123 {offsets = [0, 96], sizes = [8, 32], strides = [1, 1]} : vector<8x128xf32> to vector<8x32xf32>
    %128 = vector.extract_strided_slice %124 {offsets = [0, 64], sizes = [8, 32], strides = [1, 1]} : vector<8x128xf32> to vector<8x32xf32>
    %129 = arith.mulf %126, %108 : vector<8x32xf32>
    %130 = arith.mulf %125, %128 : vector<8x32xf32>
    %131 = arith.addf %129, %130 : vector<8x32xf32>
    %132 = math.tanh %131 : vector<8x32xf32>
    %133 = arith.mulf %127, %132 : vector<8x32xf32>
    %c4_i32 = arith.constant 4 : i32
    %134 = vector.broadcast %c4_i32 : i32 to vector<8x1xi32>
    %135 = arith.cmpi eq, %20, %134 : vector<8x1xi32>
    %136 = vector.shape_cast %135 : vector<8x1xi1> to vector<8x1xi1>
    %137 = vector.broadcast %136 : vector<8x1xi1> to vector<8x32xi1>
    %138 = arith.select %137, %133, %115 : vector<8x32xi1>, vector<8x32xf32>
    %139 = vector.extract_strided_slice %13 {offsets = [40, 0], sizes = [8, 128], strides = [1, 1]} : vector<64x128xf32> to vector<8x128xf32>
    %cst_27 = arith.constant dense<0.000000e+00> : vector<8x128xf32>
    %140 = tpu.matmul %133, %9, %cst_27 {dimension_numbers = #tpu.dot_dimension_numbers<[1], [0], [0], [1], [0, 0, 1, 1], [], []>} : vector<8x32xf32>, vector<32x128xf32>, vector<8x128xf32> -> vector<8x128xf32>
    %141 = arith.addf %139, %140 : vector<8x128xf32>
    %142 = arith.negf %141 : vector<8x128xf32>
    %143 = math.exp %142 : vector<8x128xf32>
    %cst_28 = arith.constant 1.000000e+00 : f32
    %144 = vector.broadcast %cst_28 : f32 to vector<8x128xf32>
    %145 = arith.addf %144, %143 : vector<8x128xf32>
    %146 = arith.divf %144, %145 : vector<8x128xf32>
    %147 = math.tanh %141 : vector<8x128xf32>
    %148 = vector.extract_strided_slice %146 {offsets = [0, 0], sizes = [8, 32], strides = [1, 1]} : vector<8x128xf32> to vector<8x32xf32>
    %149 = vector.extract_strided_slice %146 {offsets = [0, 32], sizes = [8, 32], strides = [1, 1]} : vector<8x128xf32> to vector<8x32xf32>
    %150 = vector.extract_strided_slice %146 {offsets = [0, 96], sizes = [8, 32], strides = [1, 1]} : vector<8x128xf32> to vector<8x32xf32>
    %151 = vector.extract_strided_slice %147 {offsets = [0, 64], sizes = [8, 32], strides = [1, 1]} : vector<8x128xf32> to vector<8x32xf32>
    %152 = arith.mulf %149, %131 : vector<8x32xf32>
    %153 = arith.mulf %148, %151 : vector<8x32xf32>
    %154 = arith.addf %152, %153 : vector<8x32xf32>
    %155 = math.tanh %154 : vector<8x32xf32>
    %156 = arith.mulf %150, %155 : vector<8x32xf32>
    %c5_i32 = arith.constant 5 : i32
    %157 = vector.broadcast %c5_i32 : i32 to vector<8x1xi32>
    %158 = arith.cmpi eq, %20, %157 : vector<8x1xi32>
    %159 = vector.shape_cast %158 : vector<8x1xi1> to vector<8x1xi1>
    %160 = vector.broadcast %159 : vector<8x1xi1> to vector<8x32xi1>
    %161 = arith.select %160, %156, %138 : vector<8x32xi1>, vector<8x32xf32>
    %162 = vector.extract_strided_slice %13 {offsets = [48, 0], sizes = [8, 128], strides = [1, 1]} : vector<64x128xf32> to vector<8x128xf32>
    %cst_29 = arith.constant dense<0.000000e+00> : vector<8x128xf32>
    %163 = tpu.matmul %156, %9, %cst_29 {dimension_numbers = #tpu.dot_dimension_numbers<[1], [0], [0], [1], [0, 0, 1, 1], [], []>} : vector<8x32xf32>, vector<32x128xf32>, vector<8x128xf32> -> vector<8x128xf32>
    %164 = arith.addf %162, %163 : vector<8x128xf32>
    %165 = arith.negf %164 : vector<8x128xf32>
    %166 = math.exp %165 : vector<8x128xf32>
    %cst_30 = arith.constant 1.000000e+00 : f32
    %167 = vector.broadcast %cst_30 : f32 to vector<8x128xf32>
    %168 = arith.addf %167, %166 : vector<8x128xf32>
    %169 = arith.divf %167, %168 : vector<8x128xf32>
    %170 = math.tanh %164 : vector<8x128xf32>
    %171 = vector.extract_strided_slice %169 {offsets = [0, 0], sizes = [8, 32], strides = [1, 1]} : vector<8x128xf32> to vector<8x32xf32>
    %172 = vector.extract_strided_slice %169 {offsets = [0, 32], sizes = [8, 32], strides = [1, 1]} : vector<8x128xf32> to vector<8x32xf32>
    %173 = vector.extract_strided_slice %169 {offsets = [0, 96], sizes = [8, 32], strides = [1, 1]} : vector<8x128xf32> to vector<8x32xf32>
    %174 = vector.extract_strided_slice %170 {offsets = [0, 64], sizes = [8, 32], strides = [1, 1]} : vector<8x128xf32> to vector<8x32xf32>
    %175 = arith.mulf %172, %154 : vector<8x32xf32>
    %176 = arith.mulf %171, %174 : vector<8x32xf32>
    %177 = arith.addf %175, %176 : vector<8x32xf32>
    %178 = math.tanh %177 : vector<8x32xf32>
    %179 = arith.mulf %173, %178 : vector<8x32xf32>
    %c6_i32 = arith.constant 6 : i32
    %180 = vector.broadcast %c6_i32 : i32 to vector<8x1xi32>
    %181 = arith.cmpi eq, %20, %180 : vector<8x1xi32>
    %182 = vector.shape_cast %181 : vector<8x1xi1> to vector<8x1xi1>
    %183 = vector.broadcast %182 : vector<8x1xi1> to vector<8x32xi1>
    %184 = arith.select %183, %179, %161 : vector<8x32xi1>, vector<8x32xf32>
    %185 = vector.extract_strided_slice %13 {offsets = [56, 0], sizes = [8, 128], strides = [1, 1]} : vector<64x128xf32> to vector<8x128xf32>
    %cst_31 = arith.constant dense<0.000000e+00> : vector<8x128xf32>
    %186 = tpu.matmul %179, %9, %cst_31 {dimension_numbers = #tpu.dot_dimension_numbers<[1], [0], [0], [1], [0, 0, 1, 1], [], []>} : vector<8x32xf32>, vector<32x128xf32>, vector<8x128xf32> -> vector<8x128xf32>
    %187 = arith.addf %185, %186 : vector<8x128xf32>
    %188 = arith.negf %187 : vector<8x128xf32>
    %189 = math.exp %188 : vector<8x128xf32>
    %cst_32 = arith.constant 1.000000e+00 : f32
    %190 = vector.broadcast %cst_32 : f32 to vector<8x128xf32>
    %191 = arith.addf %190, %189 : vector<8x128xf32>
    %192 = arith.divf %190, %191 : vector<8x128xf32>
    %193 = math.tanh %187 : vector<8x128xf32>
    %194 = vector.extract_strided_slice %192 {offsets = [0, 0], sizes = [8, 32], strides = [1, 1]} : vector<8x128xf32> to vector<8x32xf32>
    %195 = vector.extract_strided_slice %192 {offsets = [0, 32], sizes = [8, 32], strides = [1, 1]} : vector<8x128xf32> to vector<8x32xf32>
    %196 = vector.extract_strided_slice %192 {offsets = [0, 96], sizes = [8, 32], strides = [1, 1]} : vector<8x128xf32> to vector<8x32xf32>
    %197 = vector.extract_strided_slice %193 {offsets = [0, 64], sizes = [8, 32], strides = [1, 1]} : vector<8x128xf32> to vector<8x32xf32>
    %198 = arith.mulf %195, %177 : vector<8x32xf32>
    %199 = arith.mulf %194, %197 : vector<8x32xf32>
    %200 = arith.addf %198, %199 : vector<8x32xf32>
    %201 = math.tanh %200 : vector<8x32xf32>
    %202 = arith.mulf %196, %201 : vector<8x32xf32>
    %c7_i32 = arith.constant 7 : i32
    %203 = vector.broadcast %c7_i32 : i32 to vector<8x1xi32>
    %204 = arith.cmpi eq, %20, %203 : vector<8x1xi32>
    %205 = vector.shape_cast %204 : vector<8x1xi1> to vector<8x1xi1>
    %206 = vector.broadcast %205 : vector<8x1xi1> to vector<8x32xi1>
    %207 = arith.select %206, %202, %184 : vector<8x32xi1>, vector<8x32xf32>
    %c24 = arith.constant 24 : index
    %c0_33 = arith.constant 0 : index
    %208 = vector.load %arg4[%c24, %c0_33] : memref<176x128xf32, #tpu.memory_space<vmem>>, vector<32x128xf32>
    %c56 = arith.constant 56 : index
    %c0_34 = arith.constant 0 : index
    %209 = vector.load %arg4[%c56, %c0_34] : memref<176x128xf32, #tpu.memory_space<vmem>>, vector<1x128xf32>
    %cst_35 = arith.constant dense<0.000000e+00> : vector<8x128xf32>
    %210 = tpu.matmul %207, %208, %cst_35 {dimension_numbers = #tpu.dot_dimension_numbers<[1], [0], [0], [1], [0, 0, 1, 1], [], []>} : vector<8x32xf32>, vector<32x128xf32>, vector<8x128xf32> -> vector<8x128xf32>
    %211 = vector.broadcast %209 : vector<1x128xf32> to vector<8x128xf32>
    %212 = arith.addf %210, %211 : vector<8x128xf32>
    %cst_36 = arith.constant 0.000000e+00 : f32
    %213 = vector.broadcast %cst_36 : f32 to vector<8x128xf32>
    %214 = arith.maximumf %212, %213 : vector<8x128xf32>
    %215 = vector.extract_strided_slice %214 {offsets = [0, 0], sizes = [8, 32], strides = [1, 1]} : vector<8x128xf32> to vector<8x32xf32>
    %c64_37 = arith.constant 64 : index
    %c0_38 = arith.constant 0 : index
    %216 = vector.load %arg4[%c64_37, %c0_38] : memref<176x128xf32, #tpu.memory_space<vmem>>, vector<16x32xf32>
    %c80 = arith.constant 80 : index
    %c0_39 = arith.constant 0 : index
    %217 = vector.load %arg4[%c80, %c0_39] : memref<176x128xf32, #tpu.memory_space<vmem>>, vector<1x32xf32>
    %c0_40 = arith.constant 0 : index
    %c0_41 = arith.constant 0 : index
    %218 = vector.load %arg1[%c0_40, %c0_41] : memref<8x16xf32, #tpu.memory_space<vmem>>, vector<8x16xf32>
    %cst_42 = arith.constant dense<0.000000e+00> : vector<8x32xf32>
    %219 = tpu.matmul %218, %216, %cst_42 {dimension_numbers = #tpu.dot_dimension_numbers<[1], [0], [0], [1], [0, 0, 1, 1], [], []>} : vector<8x16xf32>, vector<16x32xf32>, vector<8x32xf32> -> vector<8x32xf32>
    %220 = vector.broadcast %217 : vector<1x32xf32> to vector<8x32xf32>
    %221 = arith.addf %219, %220 : vector<8x32xf32>
    %cst_43 = arith.constant 0.000000e+00 : f32
    %222 = vector.broadcast %cst_43 : f32 to vector<8x32xf32>
    %223 = arith.maximumf %221, %222 : vector<8x32xf32>
    %c88 = arith.constant 88 : index
    %c0_44 = arith.constant 0 : index
    %224 = vector.load %arg4[%c88, %c0_44] : memref<176x128xf32, #tpu.memory_space<vmem>>, vector<32x32xf32>
    %c120 = arith.constant 120 : index
    %c0_45 = arith.constant 0 : index
    %225 = vector.load %arg4[%c120, %c0_45] : memref<176x128xf32, #tpu.memory_space<vmem>>, vector<32x32xf32>
    %c152 = arith.constant 152 : index
    %c0_46 = arith.constant 0 : index
    %226 = vector.load %arg4[%c152, %c0_46] : memref<176x128xf32, #tpu.memory_space<vmem>>, vector<1x32xf32>
    %cst_47 = arith.constant dense<0.000000e+00> : vector<8x32xf32>
    %227 = tpu.matmul %215, %224, %cst_47 {dimension_numbers = #tpu.dot_dimension_numbers<[1], [0], [0], [1], [0, 0, 1, 1], [], []>} : vector<8x32xf32>, vector<32x32xf32>, vector<8x32xf32> -> vector<8x32xf32>
    %cst_48 = arith.constant dense<0.000000e+00> : vector<8x32xf32>
    %228 = tpu.matmul %223, %225, %cst_48 {dimension_numbers = #tpu.dot_dimension_numbers<[1], [0], [0], [1], [0, 0, 1, 1], [], []>} : vector<8x32xf32>, vector<32x32xf32>, vector<8x32xf32> -> vector<8x32xf32>
    %229 = arith.addf %227, %228 : vector<8x32xf32>
    %230 = vector.broadcast %226 : vector<1x32xf32> to vector<8x32xf32>
    %231 = arith.addf %229, %230 : vector<8x32xf32>
    %cst_49 = arith.constant 0.000000e+00 : f32
    %232 = vector.broadcast %cst_49 : f32 to vector<8x32xf32>
    %233 = arith.maximumf %231, %232 : vector<8x32xf32>
    %c160 = arith.constant 160 : index
    %c0_50 = arith.constant 0 : index
    %234 = vector.load %arg4[%c160, %c0_50] : memref<176x128xf32, #tpu.memory_space<vmem>>, vector<1x32xf32>
    %c168 = arith.constant 168 : index
    %c0_51 = arith.constant 0 : index
    %235 = vector.load %arg4[%c168, %c0_51] : memref<176x128xf32, #tpu.memory_space<vmem>>, vector<1x1xf32>
    %236 = vector.broadcast %234 : vector<1x32xf32> to vector<8x32xf32>
    %237 = arith.mulf %233, %236 : vector<8x32xf32>
    %cst_52 = arith.constant dense<0.000000e+00> : vector<8xf32>
    %238 = vector.multi_reduction <add>, %237, %cst_52 [1] : vector<8x32xf32> to vector<8xf32>
    %239 = vector.shape_cast %238 : vector<8xf32> to vector<8x1xf32>
    %240 = vector.broadcast %235 : vector<1x1xf32> to vector<8x1xf32>
    %241 = arith.addf %239, %240 : vector<8x1xf32>
    %242 = tpu.iota {dimensions = array<i32: 1>} : vector<8x128xi32>
    %c32_i32 = arith.constant 32 : i32
    %243 = vector.broadcast %c32_i32 : i32 to vector<8x128xi32>
    %244 = arith.cmpi slt, %242, %243 : vector<8x128xi32>
    %245 = vector.shape_cast %241 : vector<8x1xf32> to vector<8x1xf32>
    %246 = vector.broadcast %245 : vector<8x1xf32> to vector<8x128xf32>
    %247 = arith.select %244, %214, %246 : vector<8x128xi1>, vector<8x128xf32>
    %c0_53 = arith.constant 0 : index
    %c0_54 = arith.constant 0 : index
    %248 = vector.load %arg5[%c0_53, %c0_54] : memref<8x128xf32, #tpu.memory_space<vmem>>, vector<8x128xf32>
    tpu.vector_store %arg5[%c0_53, %c0_54], %247 {strides = array<i32>} : memref<8x128xf32, #tpu.memory_space<vmem>>, vector<8x128xf32>,
    return
  }
}

</mosaic_0001>

<llo_original>
// kernel: tpu_custom_call.1
$region0: #{tpu_custom_call.1}
  #allocation0 [shape = 'u32[]', space=smem, size = 0x4, offset = 0x4, fixed_abs, tag = 'smem constant byte address 0x4 - core index']
  #allocation1 [shape = 'u32[144,128]{1,0:T(1,128)}', space=vmem, size = 0x12000, scoped, tag = 'internal scratch']
  %s0 = inlined_call_operand.vmem [shape: f32[64,16], index: 0, kind: input, shape index: {}]
  %s1 = inlined_call_operand.vmem [shape: f32[8,16], index: 1, kind: input, shape index: {}]
  %s2 = inlined_call_operand.vmem [shape: s32[8,1], index: 2, kind: input, shape index: {}]
  %s3 = inlined_call_operand.vmem [shape: f32[72,128], index: 3, kind: input, shape index: {}]
  %s4 = inlined_call_operand.hbm [shape: f32[176,128], index: 4, kind: input, shape index: {}]
  %s5 = inlined_call_operand.hbm [shape: f32[8,128], index: 5, kind: output, shape index: {}]
  %s6 = sld [smem:[#allocation0]]
  $region34: #{tpu_custom_call.1} parent=0
    _
  %s8 = ssub.s32 1, %s6
  %s9 = scalar_select 0, %s8, %s6
  $region1: #{tpu_custom_call.1} parent=0
    #allocation2 [shape = 'u8[90112]{0}', space=vmem, size = 0x16000, scoped, tag = 'input window, operand 4, single buffered']
    #allocation3 [shape = 's32[1]{0}', space=sflag, size = 0x4, scoped, tag = 'scoped memory for tpu_custom_call.1']
    #allocation4 [shape = 's32[1]{0}', space=sflag, size = 0x4, scoped, tag = 'scoped memory for tpu_custom_call.1']
    #allocation5 [shape = 'u8[4096]{0}', space=vmem, size = 0x1000, scoped, tag = 'output window, operand 0, single buffered']
    %10 = vsyncpa [#allocation3], 0
    %11 = vsyncpa [#allocation4], 0
    // Predicated region
    $region2: #{tpu_custom_call.1} parent=1 // pred_check
      _
    $region3: #{tpu_custom_call.1} parent=1 // pred_check_branch
      %13 = sbr.rel (0) target = $region5
    $region4: #{tpu_custom_call.1} parent=1 // pred_region
      _
    $region5: #{tpu_custom_call.1} parent=1 // pred_fallthru
      _
    // Predicated region
    $region6: #{tpu_custom_call.1} parent=1 // pred_check
      _
    $region7: #{tpu_custom_call.1} parent=1 // pred_check_branch
      %15 = sbr.rel (0) target = $region9
    $region8: #{tpu_custom_call.1} parent=1 // pred_region
      _
    $region9: #{tpu_custom_call.1} parent=1 // pred_fallthru
      _
    // Predicated region
    $region10: #{tpu_custom_call.1} parent=1 // pred_check
      _
    $region11: #{tpu_custom_call.1} parent=1 // pred_check_branch
      %17 = sbr.rel (0) target = $region13
    $region12: #{tpu_custom_call.1} parent=1 // pred_region
      _
    $region13: #{tpu_custom_call.1} parent=1 // pred_fallthru
      _
    // Predicated region
    $region14: #{tpu_custom_call.1} parent=1 // pred_check
      _
    $region15: #{tpu_custom_call.1} parent=1 // pred_check_branch
      %19 = sbr.rel (0) target = $region17
    $region16: #{tpu_custom_call.1} parent=1 // pred_region
      _
    $region17: #{tpu_custom_call.1} parent=1 // pred_fallthru
      _
    // Predicated region
    $region18: #{tpu_custom_call.1} parent=1 // pred_check
      _
    $region19: #{tpu_custom_call.1} parent=1 // pred_check_branch
      %21 = sbr.rel (0) target = $region21
    $region20: #{tpu_custom_call.1} parent=1 // pred_region
      %s23 = ssub.s32 2816, 2816
      %24 = vsyncadd [#allocation3], %s23
      %s25 = sshll.u32 [#allocation2], 4
      %s26 = int_to_ptr.vmem [resolvable:$true] %s25
      %31 = dma.hbm_to_vmem [thread:$0]  %s4, 2816, %s26, [#allocation3], 128, 128, 8
    $region21: #{tpu_custom_call.1} parent=1 // pred_fallthru
      _
    // Predicated region
    $region22: #{tpu_custom_call.1} parent=1 // pred_check
      _
    $region23: #{tpu_custom_call.1} parent=1 // pred_check_branch
      %33 = sbr.rel (0) target = $region25
    $region24: #{tpu_custom_call.1} parent=1 // pred_region
      %34 = dma.done [#allocation3], 2816
    $region25: #{tpu_custom_call.1} parent=1 // pred_fallthru
      _
    %v35 = vld [vmem:[#allocation2] sm:$0xff]
    %v36 = vld [vmem:[#allocation2 + $0x8] sm:$0xff]
    %v37 = vld [vmem:[#allocation2 + $0x10] sm:$0x1]
    %v38 = vld [vmem:[%s0] sm:$0xff]
    %v39 = vld [vmem:[%s0 + $0x8] sm:$0xff]
    %v40 = vld [vmem:[%s0 + $0x10] sm:$0xff]
    %v41 = vld [vmem:[%s0 + $0x18] sm:$0xff]
    %v42 = vld [vmem:[%s0 + $0x20] sm:$0xff]
    %v43 = vld [vmem:[%s0 + $0x28] sm:$0xff]
    %v44 = vld [vmem:[%s0 + $0x30] sm:$0xff]
    %v45 = vld [vmem:[%s0 + $0x38] sm:$0xff]
    %v46 = vlaneseq
    %v47 = vshrl.u32 %v46, 7
    %v48 = vsub.s32 0, %v47
    %v49 = vrot.slane %v37, %v48
    %vm50 = vcmask 130048
    %v52 = vsel %vm50, %v38, 0
    %v55 = vsel %vm50, %v39, 0
    %v58 = vsel %vm50, %v40, 0
    %v61 = vsel %vm50, %v41, 0
    %v64 = vsel %vm50, %v42, 0
    %v67 = vsel %vm50, %v43, 0
    %v70 = vsel %vm50, %v44, 0
    %v73 = vsel %vm50, %v45, 0
    %75 = vmatprep.subr.mxu0 0.0
    %76 = vmatpush1.msra.mxu0 0.0
    %77 = vmatprep.subr.mxu0 0.0
    %78 = vmatpush1.msra.mxu0 0.0
    %79 = vmatprep.subr.mxu0 0.0
    %80 = vmatpush1.msra.mxu0 0.0
    %81 = vmatprep.subr.mxu0 0.0
    %82 = vmatpush1.msra.mxu0 0.0
    %83 = vmatprep.subr.mxu0 0.0
    %84 = vmatpush1.msra.mxu0 0.0
    %85 = vmatprep.subr.mxu0 0.0
    %86 = vmatpush1.msra.mxu0 0.0
    %87 = vmatprep.subr.mxu0 0.0
    %88 = vmatpush1.msra.mxu0 0.0
    %89 = vmatprep.subr.mxu0 0.0
    %90 = vmatpush1.msra.mxu0 0.0
    %91 = vmatprep.subr.mxu0 0.0
    %92 = vmatpush1.msra.mxu0 0.0
    %93 = vmatprep.subr.mxu0 0.0
    %94 = vmatpush1.msra.mxu0 0.0
    %95 = vmatprep.subr.mxu0 0.0
    %96 = vmatpush1.msra.mxu0 0.0
    %97 = vmatprep.subr.mxu0 0.0
    %98 = vmatpush1.msra.mxu0 0.0
    %99 = vmatprep.subr.mxu0 0.0
    %100 = vmatpush1.msra.mxu0 0.0
    %101 = vmatprep.subr.mxu0 0.0
    %102 = vmatpush1.msra.mxu0 0.0
    %103 = vmatprep.subr.mxu0 0.0
    %104 = vmatpush1.msra.mxu0 %v36
    %105 = vmatprep.subr.mxu0 0.0
    %106 = vmatpush1.msra.mxu0 %v35
    %107 = vmatprep.subr.mxu0 0.0
    %108 = vmatpush2.msra.mxu0 0.0
    %109 = vmatprep.subr.mxu0 0.0
    %110 = vmatpush2.msra.mxu0 0.0
    %111 = vmatprep.subr.mxu0 0.0
    %112 = vmatpush2.msra.mxu0 0.0
    %113 = vmatprep.subr.mxu0 0.0
    %114 = vmatpush2.msra.mxu0 0.0
    %115 = vmatprep.subr.mxu0 0.0
    %116 = vmatpush2.msra.mxu0 0.0
    %117 = vmatprep.subr.mxu0 0.0
    %118 = vmatpush2.msra.mxu0 0.0
    %119 = vmatprep.subr.mxu0 0.0
    %120 = vmatpush2.msra.mxu0 0.0
    %121 = vmatprep.subr.mxu0 0.0
    %122 = vmatpush2.msra.mxu0 0.0
    %123 = vmatprep.subr.mxu0 0.0
    %124 = vmatpush2.msra.mxu0 0.0
    %125 = vmatprep.subr.mxu0 0.0
    %126 = vmatpush2.msra.mxu0 0.0
    %127 = vmatprep.subr.mxu0 0.0
    %128 = vmatpush2.msra.mxu0 0.0
    %129 = vmatprep.subr.mxu0 0.0
    %130 = vmatpush2.msra.mxu0 0.0
    %131 = vmatprep.subr.mxu0 0.0
    %132 = vmatpush2.msra.mxu0 0.0
    %133 = vmatprep.subr.mxu0 0.0
    %134 = vmatpush2.msra.mxu0 0.0
    %135 = vmatprep.subr.mxu0 0.0
    %136 = vmatpush2.msra.mxu0 0.0
    %137 = vmatprep.subr.mxu0 0.0
    %138 = vmatpush2.msra.mxu0 0.0
    %139 = vmatprep.mubr.f32.mxu0 0.0
    %140 = vmatmul.mubr.f32.gmra.mxu0 %v52
    %v141 = vpop.f32.mrf.mxu0
    %v142 = vadd.f32 %v49, %v141
    %v143 = vpop.f32.mrf.mxu0
    %144 = vmatprep.mubr.f32.mxu0 0.0
    %145 = vmatmul.mubr.f32.gmra.mxu0 %v55
    %v146 = vpop.f32.mrf.mxu0
    %v147 = vadd.f32 %v49, %v146
    %v148 = vpop.f32.mrf.mxu0
    %149 = vmatprep.mubr.f32.mxu0 0.0
    %150 = vmatmul.mubr.f32.gmra.mxu0 %v58
    %v151 = vpop.f32.mrf.mxu0
    %v152 = vadd.f32 %v49, %v151
    %v153 = vpop.f32.mrf.mxu0
    %154 = vmatprep.mubr.f32.mxu0 0.0
    %155 = vmatmul.mubr.f32.gmra.mxu0 %v61
    %v156 = vpop.f32.mrf.mxu0
    %v157 = vadd.f32 %v49, %v156
    %v158 = vpop.f32.mrf.mxu0
    %159 = vmatprep.mubr.f32.mxu0 0.0
    %160 = vmatmul.mubr.f32.gmra.mxu0 %v64
    %v161 = vpop.f32.mrf.mxu0
    %v162 = vadd.f32 %v49, %v161
    %v163 = vpop.f32.mrf.mxu0
    %164 = vmatprep.mubr.f32.mxu0 0.0
    %165 = vmatmul.mubr.f32.gmra.mxu0 %v67
    %v166 = vpop.f32.mrf.mxu0
    %v167 = vadd.f32 %v49, %v166
    %v168 = vpop.f32.mrf.mxu0
    %169 = vmatprep.mubr.f32.mxu0 0.0
    %170 = vmatmul.mubr.f32.gmra.mxu0 %v70
    %v171 = vpop.f32.mrf.mxu0
    %v172 = vadd.f32 %v49, %v171
    %v173 = vpop.f32.mrf.mxu0
    %174 = vmatprep.mubr.f32.mxu0 0.0
    %175 = vmatmul.mubr.f32.gmra.mxu0 %v73
    %v176 = vpop.f32.mrf.mxu0
    %v177 = vadd.f32 %v49, %v176
    %v178 = vpop.f32.mrf.mxu0
    %179 = vdwg.mxu0
    %v180 = vmax.f32 %v142, 0.0
    %v181 = vmax.f32 %v147, 0.0
    %v182 = vmax.f32 %v152, 0.0
    %v183 = vmax.f32 %v157, 0.0
    %v184 = vmax.f32 %v162, 0.0
    %v185 = vmax.f32 %v167, 0.0
    %v186 = vmax.f32 %v172, 0.0
    %v187 = vmax.f32 %v177, 0.0
    %v188 = vld [vmem:[%s3] sm:$0xff]
    %v189 = vld [vmem:[%s3 + $0x8] sm:$0xff]
    %v190 = vld [vmem:[%s3 + $0x10] sm:$0xff]
    %v191 = vld [vmem:[%s3 + $0x18] sm:$0xff]
    %v192 = vld [vmem:[%s3 + $0x20] sm:$0xff]
    %v193 = vld [vmem:[%s3 + $0x28] sm:$0xff]
    %v194 = vld [vmem:[%s3 + $0x30] sm:$0xff]
    %v195 = vld [vmem:[%s3 + $0x38] sm:$0xff]
    %v196 = vld [vmem:[%s3 + $0x40] sm:$0x1]
    %v197 = vlaneseq
    %v198 = vshrl.u32 %v197, 7
    %v199 = vsub.s32 0, %v198
    %v200 = vrot.slane %v196, %v199
    %vm201 = vcmask 261120
    %v203 = vsel %vm201, %v180, 0
    %v206 = vsel %vm201, %v181, 0
    %v209 = vsel %vm201, %v182, 0
    %v212 = vsel %vm201, %v183, 0
    %v215 = vsel %vm201, %v184, 0
    %v218 = vsel %vm201, %v185, 0
    %v221 = vsel %vm201, %v186, 0
    %v224 = vsel %vm201, %v187, 0
    %226 = vmatprep.subr.mxu0 0.0
    %227 = vmatpush1.msra.mxu0 0.0
    %228 = vmatprep.subr.mxu0 0.0
    %229 = vmatpush1.msra.mxu0 0.0
    %230 = vmatprep.subr.mxu0 0.0
    %231 = vmatpush1.msra.mxu0 0.0
    %232 = vmatprep.subr.mxu0 0.0
    %233 = vmatpush1.msra.mxu0 0.0
    %234 = vmatprep.subr.mxu0 0.0
    %235 = vmatpush1.msra.mxu0 0.0
    %236 = vmatprep.subr.mxu0 0.0
    %237 = vmatpush1.msra.mxu0 0.0
    %238 = vmatprep.subr.mxu0 0.0
    %239 = vmatpush1.msra.mxu0 0.0
    %240 = vmatprep.subr.mxu0 0.0
    %241 = vmatpush1.msra.mxu0 0.0
    %242 = vmatprep.subr.mxu0 0.0
    %243 = vmatpush1.msra.mxu0 0.0
    %244 = vmatprep.subr.mxu0 0.0
    %245 = vmatpush1.msra.mxu0 0.0
    %246 = vmatprep.subr.mxu0 0.0
    %247 = vmatpush1.msra.mxu0 0.0
    %248 = vmatprep.subr.mxu0 0.0
    %249 = vmatpush1.msra.mxu0 0.0
    %250 = vmatprep.subr.mxu0 0.0
    %251 = vmatpush1.msra.mxu0 %v191
    %252 = vmatprep.subr.mxu0 0.0
    %253 = vmatpush1.msra.mxu0 %v190
    %254 = vmatprep.subr.mxu0 0.0
    %255 = vmatpush1.msra.mxu0 %v189
    %256 = vmatprep.subr.mxu0 0.0
    %257 = vmatpush1.msra.mxu0 %v188
    %258 = vmatprep.subr.mxu0 0.0
    %259 = vmatpush2.msra.mxu0 0.0
    %260 = vmatprep.subr.mxu0 0.0
    %261 = vmatpush2.msra.mxu0 0.0
    %262 = vmatprep.subr.mxu0 0.0
    %263 = vmatpush2.msra.mxu0 0.0
    %264 = vmatprep.subr.mxu0 0.0
    %265 = vmatpush2.msra.mxu0 0.0
    %266 = vmatprep.subr.mxu0 0.0
    %267 = vmatpush2.msra.mxu0 0.0
    %268 = vmatprep.subr.mxu0 0.0
    %269 = vmatpush2.msra.mxu0 0.0
    %270 = vmatprep.subr.mxu0 0.0
    %271 = vmatpush2.msra.mxu0 0.0
    %272 = vmatprep.subr.mxu0 0.0
    %273 = vmatpush2.msra.mxu0 0.0
    %274 = vmatprep.subr.mxu0 0.0
    %275 = vmatpush2.msra.mxu0 0.0
    %276 = vmatprep.subr.mxu0 0.0
    %277 = vmatpush2.msra.mxu0 0.0
    %278 = vmatprep.subr.mxu0 0.0
    %279 = vmatpush2.msra.mxu0 0.0
    %280 = vmatprep.subr.mxu0 0.0
    %281 = vmatpush2.msra.mxu0 0.0
    %282 = vmatprep.subr.mxu0 0.0
    %283 = vmatpush2.msra.mxu0 0.0
    %284 = vmatprep.subr.mxu0 0.0
    %285 = vmatpush2.msra.mxu0 0.0
    %286 = vmatprep.subr.mxu0 0.0
    %287 = vmatpush2.msra.mxu0 0.0
    %288 = vmatprep.subr.mxu0 0.0
    %289 = vmatpush2.msra.mxu0 0.0
    %290 = vmatprep.mubr.f32.mxu0 0.0
    %291 = vmatmul.mubr.f32.gmra.mxu0 %v203
    %v292 = vpop.f32.mrf.mxu0
    %v293 = vadd.f32 %v200, %v292
    %v294 = vpop.f32.mrf.mxu0
    %295 = vmatprep.mubr.f32.mxu0 0.0
    %296 = vmatmul.mubr.f32.gmra.mxu0 %v206
    %v297 = vpop.f32.mrf.mxu0
    %v298 = vadd.f32 %v200, %v297
    %v299 = vpop.f32.mrf.mxu0
    %300 = vmatprep.mubr.f32.mxu0 0.0
    %301 = vmatmul.mubr.f32.gmra.mxu0 %v209
    %v302 = vpop.f32.mrf.mxu0
    %v303 = vadd.f32 %v200, %v302
    %v304 = vpop.f32.mrf.mxu0
    %305 = vmatprep.mubr.f32.mxu0 0.0
    %306 = vmatmul.mubr.f32.gmra.mxu0 %v212
    %v307 = vpop.f32.mrf.mxu0
    %v308 = vadd.f32 %v200, %v307
    %v309 = vpop.f32.mrf.mxu0
    %310 = vmatprep.mubr.f32.mxu0 0.0
    %311 = vmatmul.mubr.f32.gmra.mxu0 %v215
    %v312 = vpop.f32.mrf.mxu0
    %v313 = vadd.f32 %v200, %v312
    %v314 = vpop.f32.mrf.mxu0
    %315 = vmatprep.mubr.f32.mxu0 0.0
    %316 = vmatmul.mubr.f32.gmra.mxu0 %v218
    %v317 = vpop.f32.mrf.mxu0
    %v318 = vadd.f32 %v200, %v317
    %v319 = vpop.f32.mrf.mxu0
    %320 = vmatprep.mubr.f32.mxu0 0.0
    %321 = vmatmul.mubr.f32.gmra.mxu0 %v221
    %v322 = vpop.f32.mrf.mxu0
    %v323 = vadd.f32 %v200, %v322
    %v324 = vpop.f32.mrf.mxu0
    %325 = vmatprep.mubr.f32.mxu0 0.0
    %326 = vmatmul.mubr.f32.gmra.mxu0 %v224
    %v327 = vpop.f32.mrf.mxu0
    %v328 = vadd.f32 %v200, %v327
    %v329 = vpop.f32.mrf.mxu0
    %330 = vdwg.mxu0
    %v331 = vld [vmem:[%s2] sm:$0xff]
    %vm332 = vcmp.gt.s32.totalorder %v331, 1
    %v333 = vsel %vm332, %v331, 1
    %vm334 = vcmp.lt.s32.totalorder %v333, 8
    %v335 = vsel %vm334, %v333, 8
    %v336 = vsub.s32 %v335, 1
    %v338 = vsel %vm201, 0.0, 0
    %340 = vmatprep.subr.mxu0 0.0
    %341 = vmatpush1.msra.mxu0 0.0
    %342 = vmatprep.subr.mxu0 0.0
    %343 = vmatpush1.msra.mxu0 0.0
    %344 = vmatprep.subr.mxu0 0.0
    %345 = vmatpush1.msra.mxu0 0.0
    %346 = vmatprep.subr.mxu0 0.0
    %347 = vmatpush1.msra.mxu0 0.0
    %348 = vmatprep.subr.mxu0 0.0
    %349 = vmatpush1.msra.mxu0 0.0
    %350 = vmatprep.subr.mxu0 0.0
    %351 = vmatpush1.msra.mxu0 0.0
    %352 = vmatprep.subr.mxu0 0.0
    %353 = vmatpush1.msra.mxu0 0.0
    %354 = vmatprep.subr.mxu0 0.0
    %355 = vmatpush1.msra.mxu0 0.0
    %356 = vmatprep.subr.mxu0 0.0
    %357 = vmatpush1.msra.mxu0 0.0
    %358 = vmatprep.subr.mxu0 0.0
    %359 = vmatpush1.msra.mxu0 0.0
    %360 = vmatprep.subr.mxu0 0.0
    %361 = vmatpush1.msra.mxu0 0.0
    %362 = vmatprep.subr.mxu0 0.0
    %363 = vmatpush1.msra.mxu0 0.0
    %364 = vmatprep.subr.mxu0 0.0
    %365 = vmatpush1.msra.mxu0 %v195
    %366 = vmatprep.subr.mxu0 0.0
    %367 = vmatpush1.msra.mxu0 %v194
    %368 = vmatprep.subr.mxu0 0.0
    %369 = vmatpush1.msra.mxu0 %v193
    %370 = vmatprep.subr.mxu0 0.0
    %371 = vmatpush1.msra.mxu0 %v192
    %372 = vmatprep.subr.mxu0 0.0
    %373 = vmatpush2.msra.mxu0 0.0
    %374 = vmatprep.subr.mxu0 0.0
    %375 = vmatpush2.msra.mxu0 0.0
    %376 = vmatprep.subr.mxu0 0.0
    %377 = vmatpush2.msra.mxu0 0.0
    %378 = vmatprep.subr.mxu0 0.0
    %379 = vmatpush2.msra.mxu0 0.0
    %380 = vmatprep.subr.mxu0 0.0
    %381 = vmatpush2.msra.mxu0 0.0
    %382 = vmatprep.subr.mxu0 0.0
    %383 = vmatpush2.msra.mxu0 0.0
    %384 = vmatprep.subr.mxu0 0.0
    %385 = vmatpush2.msra.mxu0 0.0
    %386 = vmatprep.subr.mxu0 0.0
    %387 = vmatpush2.msra.mxu0 0.0
    %388 = vmatprep.subr.mxu0 0.0
    %389 = vmatpush2.msra.mxu0 0.0
    %390 = vmatprep.subr.mxu0 0.0
    %391 = vmatpush2.msra.mxu0 0.0
    %392 = vmatprep.subr.mxu0 0.0
    %393 = vmatpush2.msra.mxu0 0.0
    %394 = vmatprep.subr.mxu0 0.0
    %395 = vmatpush2.msra.mxu0 0.0
    %396 = vmatprep.subr.mxu0 0.0
    %397 = vmatpush2.msra.mxu0 0.0
    %398 = vmatprep.subr.mxu0 0.0
    %399 = vmatpush2.msra.mxu0 0.0
    %400 = vmatprep.subr.mxu0 0.0
    %401 = vmatpush2.msra.mxu0 0.0
    %402 = vmatprep.subr.mxu0 0.0
    %403 = vmatpush2.msra.mxu0 0.0
    %404 = vmatprep.mubr.f32.mxu0 0.0
    %405 = vmatmul.mubr.f32.gmra.mxu0 %v338
    %v406 = vpop.f32.mrf.mxu0
    %v407 = vadd.f32 0.0, %v406
    %v408 = vpop.f32.mrf.mxu0
    %409 = vdwg.mxu0
    %v410 = vadd.f32 %v293, %v407
    %v411 = vxor.u32 %v410, 2147483648
    %v412 = vmul.f32 %v411, 1.442695
    %v413 = vpow.pop %v412
    %v414 = vadd.f32 %v413, 1.0
    %v415 = vrcp.pop %v414
    %v416 = vmul.f32 1.0, %v415
    %v417 = vtanh.pop %v410
    %v418 = vmul.f32 %v416, 0.0
    %420 = vrot.lane.b32.xlu0 %v417, 64
    %v421 = vpop.permute.xlu0 %420
    %v423 = vmul.f32 %v416, %v421
    %425 = vrot.lane.b32.xlu0 %v423, 32
    %v426 = vpop.permute.xlu0 %425
    %v428 = vadd.f32 %v418, %v426
    %v429 = vtanh.pop %v428
    %431 = vrot.lane.b32.xlu0 %v429, 64
    %v432 = vpop.permute.xlu0 %431
    %v434 = vmul.f32 %v416, %v432
    %vm435 = vcmp.eq.s32.totalorder %v336, 0
    %v436 = vsel %vm435, 1, 0
    %437 = vset.pattern.permute.xlu0 0
    %438 = vperm.xlu0 %437, %v436
    %v439 = vpop.permute.xlu0 %438
    %vm440 = vcmp.eq.s32.totalorder %v439, 1
    %v441 = vsel %vm440, %v434, 0.0
    %443 = vrot.lane.b32.xlu0 %v434, 32
    %v444 = vpop.permute.xlu0 %443
    %v445 = vsel %vm201, %v444, 0
    %447 = vmatprep.subr.mxu0 0.0
    %448 = vmatpush1.msra.mxu0 0.0
    %449 = vmatprep.subr.mxu0 0.0
    %450 = vmatpush1.msra.mxu0 0.0
    %451 = vmatprep.subr.mxu0 0.0
    %452 = vmatpush1.msra.mxu0 0.0
    %453 = vmatprep.subr.mxu0 0.0
    %454 = vmatpush1.msra.mxu0 0.0
    %455 = vmatprep.subr.mxu0 0.0
    %456 = vmatpush1.msra.mxu0 0.0
    %457 = vmatprep.subr.mxu0 0.0
    %458 = vmatpush1.msra.mxu0 0.0
    %459 = vmatprep.subr.mxu0 0.0
    %460 = vmatpush1.msra.mxu0 0.0
    %461 = vmatprep.subr.mxu0 0.0
    %462 = vmatpush1.msra.mxu0 0.0
    %463 = vmatprep.subr.mxu0 0.0
    %464 = vmatpush1.msra.mxu0 0.0
    %465 = vmatprep.subr.mxu0 0.0
    %466 = vmatpush1.msra.mxu0 0.0
    %467 = vmatprep.subr.mxu0 0.0
    %468 = vmatpush1.msra.mxu0 0.0
    %469 = vmatprep.subr.mxu0 0.0
    %470 = vmatpush1.msra.mxu0 0.0
    %471 = vmatprep.subr.mxu0 0.0
    %472 = vmatpush1.msra.mxu0 %v195
    %473 = vmatprep.subr.mxu0 0.0
    %474 = vmatpush1.msra.mxu0 %v194
    %475 = vmatprep.subr.mxu0 0.0
    %476 = vmatpush1.msra.mxu0 %v193
    %477 = vmatprep.subr.mxu0 0.0
    %478 = vmatpush1.msra.mxu0 %v192
    %479 = vmatprep.subr.mxu0 0.0
    %480 = vmatpush2.msra.mxu0 0.0
    %481 = vmatprep.subr.mxu0 0.0
    %482 = vmatpush2.msra.mxu0 0.0
    %483 = vmatprep.subr.mxu0 0.0
    %484 = vmatpush2.msra.mxu0 0.0
    %485 = vmatprep.subr.mxu0 0.0
    %486 = vmatpush2.msra.mxu0 0.0
    %487 = vmatprep.subr.mxu0 0.0
    %488 = vmatpush2.msra.mxu0 0.0
    %489 = vmatprep.subr.mxu0 0.0
    %490 = vmatpush2.msra.mxu0 0.0
    %491 = vmatprep.subr.mxu0 0.0
    %492 = vmatpush2.msra.mxu0 0.0
    %493 = vmatprep.subr.mxu0 0.0
    %494 = vmatpush2.msra.mxu0 0.0
    %495 = vmatprep.subr.mxu0 0.0
    %496 = vmatpush2.msra.mxu0 0.0
    %497 = vmatprep.subr.mxu0 0.0
    %498 = vmatpush2.msra.mxu0 0.0
    %499 = vmatprep.subr.mxu0 0.0
    %500 = vmatpush2.msra.mxu0 0.0
    %501 = vmatprep.subr.mxu0 0.0
    %502 = vmatpush2.msra.mxu0 0.0
    %503 = vmatprep.subr.mxu0 0.0
    %504 = vmatpush2.msra.mxu0 0.0
    %505 = vmatprep.subr.mxu0 0.0
    %506 = vmatpush2.msra.mxu0 0.0
    %507 = vmatprep.subr.mxu0 0.0
    %508 = vmatpush2.msra.mxu0 0.0
    %509 = vmatprep.subr.mxu0 0.0
    %510 = vmatpush2.msra.mxu0 0.0
    %511 = vmatprep.mubr.f32.mxu0 0.0
    %512 = vmatmul.mubr.f32.gmra.mxu0 %v445
    %v513 = vpop.f32.mrf.mxu0
    %v514 = vadd.f32 0.0, %v513
    %v515 = vpop.f32.mrf.mxu0
    %516 = vdwg.mxu0
    %v517 = vadd.f32 %v298, %v514
    %v518 = vxor.u32 %v517, 2147483648
    %v519 = vmul.f32 %v518, 1.442695
    %v520 = vpow.pop %v519
    %v521 = vadd.f32 %v520, 1.0
    %v522 = vrcp.pop %v521
    %v523 = vmul.f32 1.0, %v522
    %v524 = vtanh.pop %v517
    %v525 = vmul.f32 %v523, %v428
    %527 = vrot.lane.b32.xlu0 %v524, 64
    %v528 = vpop.permute.xlu0 %527
    %v530 = vmul.f32 %v523, %v528
    %532 = vrot.lane.b32.xlu0 %v530, 32
    %v533 = vpop.permute.xlu0 %532
    %v535 = vadd.f32 %v525, %v533
    %v536 = vtanh.pop %v535
    %538 = vrot.lane.b32.xlu0 %v536, 64
    %v539 = vpop.permute.xlu0 %538
    %v541 = vmul.f32 %v523, %v539
    %vm542 = vcmp.eq.s32.totalorder %v336, 1
    %v543 = vsel %vm542, 1, 0
    %544 = vset.pattern.permute.xlu0 0
    %545 = vperm.xlu0 %544, %v543
    %v546 = vpop.permute.xlu0 %545
    %vm547 = vcmp.eq.s32.totalorder %v546, 1
    %v548 = vsel %vm547, %v541, %v441
    %550 = vrot.lane.b32.xlu0 %v541, 32
    %v551 = vpop.permute.xlu0 %550
    %v552 = vsel %vm201, %v551, 0
    %554 = vmatprep.subr.mxu0 0.0
    %555 = vmatpush1.msra.mxu0 0.0
    %556 = vmatprep.subr.mxu0 0.0
    %557 = vmatpush1.msra.mxu0 0.0
    %558 = vmatprep.subr.mxu0 0.0
    %559 = vmatpush1.msra.mxu0 0.0
    %560 = vmatprep.subr.mxu0 0.0
    %561 = vmatpush1.msra.mxu0 0.0
    %562 = vmatprep.subr.mxu0 0.0
    %563 = vmatpush1.msra.mxu0 0.0
    %564 = vmatprep.subr.mxu0 0.0
    %565 = vmatpush1.msra.mxu0 0.0
    %566 = vmatprep.subr.mxu0 0.0
    %567 = vmatpush1.msra.mxu0 0.0
    %568 = vmatprep.subr.mxu0 0.0
    %569 = vmatpush1.msra.mxu0 0.0
    %570 = vmatprep.subr.mxu0 0.0
    %571 = vmatpush1.msra.mxu0 0.0
    %572 = vmatprep.subr.mxu0 0.0
    %573 = vmatpush1.msra.mxu0 0.0
    %574 = vmatprep.subr.mxu0 0.0
    %575 = vmatpush1.msra.mxu0 0.0
    %576 = vmatprep.subr.mxu0 0.0
    %577 = vmatpush1.msra.mxu0 0.0
    %578 = vmatprep.subr.mxu0 0.0
    %579 = vmatpush1.msra.mxu0 %v195
    %580 = vmatprep.subr.mxu0 0.0
    %581 = vmatpush1.msra.mxu0 %v194
    %582 = vmatprep.subr.mxu0 0.0
    %583 = vmatpush1.msra.mxu0 %v193
    %584 = vmatprep.subr.mxu0 0.0
    %585 = vmatpush1.msra.mxu0 %v192
    %586 = vmatprep.subr.mxu0 0.0
    %587 = vmatpush2.msra.mxu0 0.0
    %588 = vmatprep.subr.mxu0 0.0
    %589 = vmatpush2.msra.mxu0 0.0
    %590 = vmatprep.subr.mxu0 0.0
    %591 = vmatpush2.msra.mxu0 0.0
    %592 = vmatprep.subr.mxu0 0.0
    %593 = vmatpush2.msra.mxu0 0.0
    %594 = vmatprep.subr.mxu0 0.0
    %595 = vmatpush2.msra.mxu0 0.0
    %596 = vmatprep.subr.mxu0 0.0
    %597 = vmatpush2.msra.mxu0 0.0
    %598 = vmatprep.subr.mxu0 0.0
    %599 = vmatpush2.msra.mxu0 0.0
    %600 = vmatprep.subr.mxu0 0.0
    %601 = vmatpush2.msra.mxu0 0.0
    %602 = vmatprep.subr.mxu0 0.0
    %603 = vmatpush2.msra.mxu0 0.0
    %604 = vmatprep.subr.mxu0 0.0
    %605 = vmatpush2.msra.mxu0 0.0
    %606 = vmatprep.subr.mxu0 0.0
    %607 = vmatpush2.msra.mxu0 0.0
    %608 = vmatprep.subr.mxu0 0.0
    %609 = vmatpush2.msra.mxu0 0.0
    %610 = vmatprep.subr.mxu0 0.0
    %611 = vmatpush2.msra.mxu0 0.0
    %612 = vmatprep.subr.mxu0 0.0
    %613 = vmatpush2.msra.mxu0 0.0
    %614 = vmatprep.subr.mxu0 0.0
    %615 = vmatpush2.msra.mxu0 0.0
    %616 = vmatprep.subr.mxu0 0.0
    %617 = vmatpush2.msra.mxu0 0.0
    %618 = vmatprep.mubr.f32.mxu0 0.0
    %619 = vmatmul.mubr.f32.gmra.mxu0 %v552
    %v620 = vpop.f32.mrf.mxu0
    %v621 = vadd.f32 0.0, %v620
    %v622 = vpop.f32.mrf.mxu0
    %623 = vdwg.mxu0
    %v624 = vadd.f32 %v303, %v621
    %v625 = vxor.u32 %v624, 2147483648
    %v626 = vmul.f32 %v625, 1.442695
    %v627 = vpow.pop %v626
    %v628 = vadd.f32 %v627, 1.0
    %v629 = vrcp.pop %v628
    %v630 = vmul.f32 1.0, %v629
    %v631 = vtanh.pop %v624
    %v632 = vmul.f32 %v630, %v535
    %634 = vrot.lane.b32.xlu0 %v631, 64
    %v635 = vpop.permute.xlu0 %634
    %v637 = vmul.f32 %v630, %v635
    %639 = vrot.lane.b32.xlu0 %v637, 32
    %v640 = vpop.permute.xlu0 %639
    %v642 = vadd.f32 %v632, %v640
    %v643 = vtanh.pop %v642
    %645 = vrot.lane.b32.xlu0 %v643, 64
    %v646 = vpop.permute.xlu0 %645
    %v648 = vmul.f32 %v630, %v646
    %vm649 = vcmp.eq.s32.totalorder %v336, 2
    %v650 = vsel %vm649, 1, 0
    %651 = vset.pattern.permute.xlu0 0
    %652 = vperm.xlu0 %651, %v650
    %v653 = vpop.permute.xlu0 %652
    %vm654 = vcmp.eq.s32.totalorder %v653, 1
    %v655 = vsel %vm654, %v648, %v548
    %657 = vrot.lane.b32.xlu0 %v648, 32
    %v658 = vpop.permute.xlu0 %657
    %v659 = vsel %vm201, %v658, 0
    %661 = vmatprep.subr.mxu0 0.0
    %662 = vmatpush1.msra.mxu0 0.0
    %663 = vmatprep.subr.mxu0 0.0
    %664 = vmatpush1.msra.mxu0 0.0
    %665 = vmatprep.subr.mxu0 0.0
    %666 = vmatpush1.msra.mxu0 0.0
    %667 = vmatprep.subr.mxu0 0.0
    %668 = vmatpush1.msra.mxu0 0.0
    %669 = vmatprep.subr.mxu0 0.0
    %670 = vmatpush1.msra.mxu0 0.0
    %671 = vmatprep.subr.mxu0 0.0
    %672 = vmatpush1.msra.mxu0 0.0
    %673 = vmatprep.subr.mxu0 0.0
    %674 = vmatpush1.msra.mxu0 0.0
    %675 = vmatprep.subr.mxu0 0.0
    %676 = vmatpush1.msra.mxu0 0.0
    %677 = vmatprep.subr.mxu0 0.0
    %678 = vmatpush1.msra.mxu0 0.0
    %679 = vmatprep.subr.mxu0 0.0
    %680 = vmatpush1.msra.mxu0 0.0
    %681 = vmatprep.subr.mxu0 0.0
    %682 = vmatpush1.msra.mxu0 0.0
    %683 = vmatprep.subr.mxu0 0.0
    %684 = vmatpush1.msra.mxu0 0.0
    %685 = vmatprep.subr.mxu0 0.0
    %686 = vmatpush1.msra.mxu0 %v195
    %687 = vmatprep.subr.mxu0 0.0
    %688 = vmatpush1.msra.mxu0 %v194
    %689 = vmatprep.subr.mxu0 0.0
    %690 = vmatpush1.msra.mxu0 %v193
    %691 = vmatprep.subr.mxu0 0.0
    %692 = vmatpush1.msra.mxu0 %v192
    %693 = vmatprep.subr.mxu0 0.0
    %694 = vmatpush2.msra.mxu0 0.0
    %695 = vmatprep.subr.mxu0 0.0
    %696 = vmatpush2.msra.mxu0 0.0
    %697 = vmatprep.subr.mxu0 0.0
    %698 = vmatpush2.msra.mxu0 0.0
    %699 = vmatprep.subr.mxu0 0.0
    %700 = vmatpush2.msra.mxu0 0.0
    %701 = vmatprep.subr.mxu0 0.0
    %702 = vmatpush2.msra.mxu0 0.0
    %703 = vmatprep.subr.mxu0 0.0
    %704 = vmatpush2.msra.mxu0 0.0
    %705 = vmatprep.subr.mxu0 0.0
    %706 = vmatpush2.msra.mxu0 0.0
    %707 = vmatprep.subr.mxu0 0.0
    %708 = vmatpush2.msra.mxu0 0.0
    %709 = vmatprep.subr.mxu0 0.0
    %710 = vmatpush2.msra.mxu0 0.0
    %711 = vmatprep.subr.mxu0 0.0
    %712 = vmatpush2.msra.mxu0 0.0
    %713 = vmatprep.subr.mxu0 0.0
    %714 = vmatpush2.msra.mxu0 0.0
    %715 = vmatprep.subr.mxu0 0.0
    %716 = vmatpush2.msra.mxu0 0.0
    %717 = vmatprep.subr.mxu0 0.0
    %718 = vmatpush2.msra.mxu0 0.0
    %719 = vmatprep.subr.mxu0 0.0
    %720 = vmatpush2.msra.mxu0 0.0
    %721 = vmatprep.subr.mxu0 0.0
    %722 = vmatpush2.msra.mxu0 0.0
    %723 = vmatprep.subr.mxu0 0.0
    %724 = vmatpush2.msra.mxu0 0.0
    %725 = vmatprep.mubr.f32.mxu0 0.0
    %726 = vmatmul.mubr.f32.gmra.mxu0 %v659
    %v727 = vpop.f32.mrf.mxu0
    %v728 = vadd.f32 0.0, %v727
    %v729 = vpop.f32.mrf.mxu0
    %730 = vdwg.mxu0
    %v731 = vadd.f32 %v308, %v728
    %v732 = vxor.u32 %v731, 2147483648
    %v733 = vmul.f32 %v732, 1.442695
    %v734 = vpow.pop %v733
    %v735 = vadd.f32 %v734, 1.0
    %v736 = vrcp.pop %v735
    %v737 = vmul.f32 1.0, %v736
    %v738 = vtanh.pop %v731
    %v739 = vmul.f32 %v737, %v642
    %741 = vrot.lane.b32.xlu0 %v738, 64
    %v742 = vpop.permute.xlu0 %741
    %v744 = vmul.f32 %v737, %v742
    %746 = vrot.lane.b32.xlu0 %v744, 32
    %v747 = vpop.permute.xlu0 %746
    %v749 = vadd.f32 %v739, %v747
    %v750 = vtanh.pop %v749
    %752 = vrot.lane.b32.xlu0 %v750, 64
    %v753 = vpop.permute.xlu0 %752
    %v755 = vmul.f32 %v737, %v753
    %vm756 = vcmp.eq.s32.totalorder %v336, 3
    %v757 = vsel %vm756, 1, 0
    %758 = vset.pattern.permute.xlu0 0
    %759 = vperm.xlu0 %758, %v757
    %v760 = vpop.permute.xlu0 %759
    %vm761 = vcmp.eq.s32.totalorder %v760, 1
    %v762 = vsel %vm761, %v755, %v655
    %764 = vrot.lane.b32.xlu0 %v755, 32
    %v765 = vpop.permute.xlu0 %764
    %v766 = vsel %vm201, %v765, 0
    %768 = vmatprep.subr.mxu0 0.0
    %769 = vmatpush1.msra.mxu0 0.0
    %770 = vmatprep.subr.mxu0 0.0
    %771 = vmatpush1.msra.mxu0 0.0
    %772 = vmatprep.subr.mxu0 0.0
    %773 = vmatpush1.msra.mxu0 0.0
    %774 = vmatprep.subr.mxu0 0.0
    %775 = vmatpush1.msra.mxu0 0.0
    %776 = vmatprep.subr.mxu0 0.0
    %777 = vmatpush1.msra.mxu0 0.0
    %778 = vmatprep.subr.mxu0 0.0
    %779 = vmatpush1.msra.mxu0 0.0
    %780 = vmatprep.subr.mxu0 0.0
    %781 = vmatpush1.msra.mxu0 0.0
    %782 = vmatprep.subr.mxu0 0.0
    %783 = vmatpush1.msra.mxu0 0.0
    %784 = vmatprep.subr.mxu0 0.0
    %785 = vmatpush1.msra.mxu0 0.0
    %786 = vmatprep.subr.mxu0 0.0
    %787 = vmatpush1.msra.mxu0 0.0
    %788 = vmatprep.subr.mxu0 0.0
    %789 = vmatpush1.msra.mxu0 0.0
    %790 = vmatprep.subr.mxu0 0.0
    %791 = vmatpush1.msra.mxu0 0.0
    %792 = vmatprep.subr.mxu0 0.0
    %793 = vmatpush1.msra.mxu0 %v195
    %794 = vmatprep.subr.mxu0 0.0
    %795 = vmatpush1.msra.mxu0 %v194
    %796 = vmatprep.subr.mxu0 0.0
    %797 = vmatpush1.msra.mxu0 %v193
    %798 = vmatprep.subr.mxu0 0.0
    %799 = vmatpush1.msra.mxu0 %v192
    %800 = vmatprep.subr.mxu0 0.0
    %801 = vmatpush2.msra.mxu0 0.0
    %802 = vmatprep.subr.mxu0 0.0
    %803 = vmatpush2.msra.mxu0 0.0
    %804 = vmatprep.subr.mxu0 0.0
    %805 = vmatpush2.msra.mxu0 0.0
    %806 = vmatprep.subr.mxu0 0.0
    %807 = vmatpush2.msra.mxu0 0.0
    %808 = vmatprep.subr.mxu0 0.0
    %809 = vmatpush2.msra.mxu0 0.0
    %810 = vmatprep.subr.mxu0 0.0
    %811 = vmatpush2.msra.mxu0 0.0
    %812 = vmatprep.subr.mxu0 0.0
    %813 = vmatpush2.msra.mxu0 0.0
    %814 = vmatprep.subr.mxu0 0.0
    %815 = vmatpush2.msra.mxu0 0.0
    %816 = vmatprep.subr.mxu0 0.0
    %817 = vmatpush2.msra.mxu0 0.0
    %818 = vmatprep.subr.mxu0 0.0
    %819 = vmatpush2.msra.mxu0 0.0
    %820 = vmatprep.subr.mxu0 0.0
    %821 = vmatpush2.msra.mxu0 0.0
    %822 = vmatprep.subr.mxu0 0.0
    %823 = vmatpush2.msra.mxu0 0.0
    %824 = vmatprep.subr.mxu0 0.0
    %825 = vmatpush2.msra.mxu0 0.0
    %826 = vmatprep.subr.mxu0 0.0
    %827 = vmatpush2.msra.mxu0 0.0
    %828 = vmatprep.subr.mxu0 0.0
    %829 = vmatpush2.msra.mxu0 0.0
    %830 = vmatprep.subr.mxu0 0.0
    %831 = vmatpush2.msra.mxu0 0.0
    %832 = vmatprep.mubr.f32.mxu0 0.0
    %833 = vmatmul.mubr.f32.gmra.mxu0 %v766
    %v834 = vpop.f32.mrf.mxu0
    %v835 = vadd.f32 0.0, %v834
    %v836 = vpop.f32.mrf.mxu0
    %837 = vdwg.mxu0
    %v838 = vadd.f32 %v313, %v835
    %v839 = vxor.u32 %v838, 2147483648
    %v840 = vmul.f32 %v839, 1.442695
    %v841 = vpow.pop %v840
    %v842 = vadd.f32 %v841, 1.0
    %v843 = vrcp.pop %v842
    %v844 = vmul.f32 1.0, %v843
    %v845 = vtanh.pop %v838
    %v846 = vmul.f32 %v844, %v749
    %848 = vrot.lane.b32.xlu0 %v845, 64
    %v849 = vpop.permute.xlu0 %848
    %v851 = vmul.f32 %v844, %v849
    %853 = vrot.lane.b32.xlu0 %v851, 32
    %v854 = vpop.permute.xlu0 %853
    %v856 = vadd.f32 %v846, %v854
    %v857 = vtanh.pop %v856
    %859 = vrot.lane.b32.xlu0 %v857, 64
    %v860 = vpop.permute.xlu0 %859
    %v862 = vmul.f32 %v844, %v860
    %vm863 = vcmp.eq.s32.totalorder %v336, 4
    %v864 = vsel %vm863, 1, 0
    %865 = vset.pattern.permute.xlu0 0
    %866 = vperm.xlu0 %865, %v864
    %v867 = vpop.permute.xlu0 %866
    %vm868 = vcmp.eq.s32.totalorder %v867, 1
    %v869 = vsel %vm868, %v862, %v762
    %871 = vrot.lane.b32.xlu0 %v862, 32
    %v872 = vpop.permute.xlu0 %871
    %v873 = vsel %vm201, %v872, 0
    %875 = vmatprep.subr.mxu0 0.0
    %876 = vmatpush1.msra.mxu0 0.0
    %877 = vmatprep.subr.mxu0 0.0
    %878 = vmatpush1.msra.mxu0 0.0
    %879 = vmatprep.subr.mxu0 0.0
    %880 = vmatpush1.msra.mxu0 0.0
    %881 = vmatprep.subr.mxu0 0.0
    %882 = vmatpush1.msra.mxu0 0.0
    %883 = vmatprep.subr.mxu0 0.0
    %884 = vmatpush1.msra.mxu0 0.0
    %885 = vmatprep.subr.mxu0 0.0
    %886 = vmatpush1.msra.mxu0 0.0
    %887 = vmatprep.subr.mxu0 0.0
    %888 = vmatpush1.msra.mxu0 0.0
    %889 = vmatprep.subr.mxu0 0.0
    %890 = vmatpush1.msra.mxu0 0.0
    %891 = vmatprep.subr.mxu0 0.0
    %892 = vmatpush1.msra.mxu0 0.0
    %893 = vmatprep.subr.mxu0 0.0
    %894 = vmatpush1.msra.mxu0 0.0
    %895 = vmatprep.subr.mxu0 0.0
    %896 = vmatpush1.msra.mxu0 0.0
    %897 = vmatprep.subr.mxu0 0.0
    %898 = vmatpush1.msra.mxu0 0.0
    %899 = vmatprep.subr.mxu0 0.0
    %900 = vmatpush1.msra.mxu0 %v195
    %901 = vmatprep.subr.mxu0 0.0
    %902 = vmatpush1.msra.mxu0 %v194
    %903 = vmatprep.subr.mxu0 0.0
    %904 = vmatpush1.msra.mxu0 %v193
    %905 = vmatprep.subr.mxu0 0.0
    %906 = vmatpush1.msra.mxu0 %v192
    %907 = vmatprep.subr.mxu0 0.0
    %908 = vmatpush2.msra.mxu0 0.0
    %909 = vmatprep.subr.mxu0 0.0
    %910 = vmatpush2.msra.mxu0 0.0
    %911 = vmatprep.subr.mxu0 0.0
    %912 = vmatpush2.msra.mxu0 0.0
    %913 = vmatprep.subr.mxu0 0.0
    %914 = vmatpush2.msra.mxu0 0.0
    %915 = vmatprep.subr.mxu0 0.0
    %916 = vmatpush2.msra.mxu0 0.0
    %917 = vmatprep.subr.mxu0 0.0
    %918 = vmatpush2.msra.mxu0 0.0
    %919 = vmatprep.subr.mxu0 0.0
    %920 = vmatpush2.msra.mxu0 0.0
    %921 = vmatprep.subr.mxu0 0.0
    %922 = vmatpush2.msra.mxu0 0.0
    %923 = vmatprep.subr.mxu0 0.0
    %924 = vmatpush2.msra.mxu0 0.0
    %925 = vmatprep.subr.mxu0 0.0
    %926 = vmatpush2.msra.mxu0 0.0
    %927 = vmatprep.subr.mxu0 0.0
    %928 = vmatpush2.msra.mxu0 0.0
    %929 = vmatprep.subr.mxu0 0.0
    %930 = vmatpush2.msra.mxu0 0.0
    %931 = vmatprep.subr.mxu0 0.0
    %932 = vmatpush2.msra.mxu0 0.0
    %933 = vmatprep.subr.mxu0 0.0
    %934 = vmatpush2.msra.mxu0 0.0
    %935 = vmatprep.subr.mxu0 0.0
    %936 = vmatpush2.msra.mxu0 0.0
    %937 = vmatprep.subr.mxu0 0.0
    %938 = vmatpush2.msra.mxu0 0.0
    %939 = vmatprep.mubr.f32.mxu0 0.0
    %940 = vmatmul.mubr.f32.gmra.mxu0 %v873
    %v941 = vpop.f32.mrf.mxu0
    %v942 = vadd.f32 0.0, %v941
    %v943 = vpop.f32.mrf.mxu0
    %944 = vdwg.mxu0
    %v945 = vadd.f32 %v318, %v942
    %v946 = vxor.u32 %v945, 2147483648
    %v947 = vmul.f32 %v946, 1.442695
    %v948 = vpow.pop %v947
    %v949 = vadd.f32 %v948, 1.0
    %v950 = vrcp.pop %v949
    %v951 = vmul.f32 1.0, %v950
    %v952 = vtanh.pop %v945
    %v953 = vmul.f32 %v951, %v856
    %955 = vrot.lane.b32.xlu0 %v952, 64
    %v956 = vpop.permute.xlu0 %955
    %v958 = vmul.f32 %v951, %v956
    %960 = vrot.lane.b32.xlu0 %v958, 32
    %v961 = vpop.permute.xlu0 %960
    %v963 = vadd.f32 %v953, %v961
    %v964 = vtanh.pop %v963
    %966 = vrot.lane.b32.xlu0 %v964, 64
    %v967 = vpop.permute.xlu0 %966
    %v969 = vmul.f32 %v951, %v967
    %vm970 = vcmp.eq.s32.totalorder %v336, 5
    %v971 = vsel %vm970, 1, 0
    %972 = vset.pattern.permute.xlu0 0
    %973 = vperm.xlu0 %972, %v971
    %v974 = vpop.permute.xlu0 %973
    %vm975 = vcmp.eq.s32.totalorder %v974, 1
    %v976 = vsel %vm975, %v969, %v869
    %978 = vrot.lane.b32.xlu0 %v969, 32
    %v979 = vpop.permute.xlu0 %978
    %v980 = vsel %vm201, %v979, 0
    %982 = vmatprep.subr.mxu0 0.0
    %983 = vmatpush1.msra.mxu0 0.0
    %984 = vmatprep.subr.mxu0 0.0
    %985 = vmatpush1.msra.mxu0 0.0
    %986 = vmatprep.subr.mxu0 0.0
    %987 = vmatpush1.msra.mxu0 0.0
    %988 = vmatprep.subr.mxu0 0.0
    %989 = vmatpush1.msra.mxu0 0.0
    %990 = vmatprep.subr.mxu0 0.0
    %991 = vmatpush1.msra.mxu0 0.0
    %992 = vmatprep.subr.mxu0 0.0
    %993 = vmatpush1.msra.mxu0 0.0
    %994 = vmatprep.subr.mxu0 0.0
    %995 = vmatpush1.msra.mxu0 0.0
    %996 = vmatprep.subr.mxu0 0.0
    %997 = vmatpush1.msra.mxu0 0.0
    %998 = vmatprep.subr.mxu0 0.0
    %999 = vmatpush1.msra.mxu0 0.0
    %1000 = vmatprep.subr.mxu0 0.0
    %1001 = vmatpush1.msra.mxu0 0.0
    %1002 = vmatprep.subr.mxu0 0.0
    %1003 = vmatpush1.msra.mxu0 0.0
    %1004 = vmatprep.subr.mxu0 0.0
    %1005 = vmatpush1.msra.mxu0 0.0
    %1006 = vmatprep.subr.mxu0 0.0
    %1007 = vmatpush1.msra.mxu0 %v195
    %1008 = vmatprep.subr.mxu0 0.0
    %1009 = vmatpush1.msra.mxu0 %v194
    %1010 = vmatprep.subr.mxu0 0.0
    %1011 = vmatpush1.msra.mxu0 %v193
    %1012 = vmatprep.subr.mxu0 0.0
    %1013 = vmatpush1.msra.mxu0 %v192
    %1014 = vmatprep.subr.mxu0 0.0
    %1015 = vmatpush2.msra.mxu0 0.0
    %1016 = vmatprep.subr.mxu0 0.0
    %1017 = vmatpush2.msra.mxu0 0.0
    %1018 = vmatprep.subr.mxu0 0.0
    %1019 = vmatpush2.msra.mxu0 0.0
    %1020 = vmatprep.subr.mxu0 0.0
    %1021 = vmatpush2.msra.mxu0 0.0
    %1022 = vmatprep.subr.mxu0 0.0
    %1023 = vmatpush2.msra.mxu0 0.0
    %1024 = vmatprep.subr.mxu0 0.0
    %1025 = vmatpush2.msra.mxu0 0.0
    %1026 = vmatprep.subr.mxu0 0.0
    %1027 = vmatpush2.msra.mxu0 0.0
    %1028 = vmatprep.subr.mxu0 0.0
    %1029 = vmatpush2.msra.mxu0 0.0
    %1030 = vmatprep.subr.mxu0 0.0
    %1031 = vmatpush2.msra.mxu0 0.0
    %1032 = vmatprep.subr.mxu0 0.0
    %1033 = vmatpush2.msra.mxu0 0.0
    %1034 = vmatprep.subr.mxu0 0.0
    %1035 = vmatpush2.msra.mxu0 0.0
    %1036 = vmatprep.subr.mxu0 0.0
    %1037 = vmatpush2.msra.mxu0 0.0
    %1038 = vmatprep.subr.mxu0 0.0
    %1039 = vmatpush2.msra.mxu0 0.0
    %1040 = vmatprep.subr.mxu0 0.0
    %1041 = vmatpush2.msra.mxu0 0.0
    %1042 = vmatprep.subr.mxu0 0.0
    %1043 = vmatpush2.msra.mxu0 0.0
    %1044 = vmatprep.subr.mxu0 0.0
    %1045 = vmatpush2.msra.mxu0 0.0
    %1046 = vmatprep.mubr.f32.mxu0 0.0
    %1047 = vmatmul.mubr.f32.gmra.mxu0 %v980
    %v1048 = vpop.f32.mrf.mxu0
    %v1049 = vadd.f32 0.0, %v1048
    %v1050 = vpop.f32.mrf.mxu0
    %1051 = vdwg.mxu0
    %v1052 = vadd.f32 %v323, %v1049
    %v1053 = vxor.u32 %v1052, 2147483648
    %v1054 = vmul.f32 %v1053, 1.442695
    %v1055 = vpow.pop %v1054
    %v1056 = vadd.f32 %v1055, 1.0
    %v1057 = vrcp.pop %v1056
    %v1058 = vmul.f32 1.0, %v1057
    %v1059 = vtanh.pop %v1052
    %v1060 = vmul.f32 %v1058, %v963
    %1062 = vrot.lane.b32.xlu0 %v1059, 64
    %v1063 = vpop.permute.xlu0 %1062
    %v1065 = vmul.f32 %v1058, %v1063
    %1067 = vrot.lane.b32.xlu0 %v1065, 32
    %v1068 = vpop.permute.xlu0 %1067
    %v1070 = vadd.f32 %v1060, %v1068
    %v1071 = vtanh.pop %v1070
    %1073 = vrot.lane.b32.xlu0 %v1071, 64
    %v1074 = vpop.permute.xlu0 %1073
    %v1076 = vmul.f32 %v1058, %v1074
    %vm1077 = vcmp.eq.s32.totalorder %v336, 6
    %v1078 = vsel %vm1077, 1, 0
    %1079 = vset.pattern.permute.xlu0 0
    %1080 = vperm.xlu0 %1079, %v1078
    %v1081 = vpop.permute.xlu0 %1080
    %vm1082 = vcmp.eq.s32.totalorder %v1081, 1
    %v1083 = vsel %vm1082, %v1076, %v976
    %1085 = vrot.lane.b32.xlu0 %v1076, 32
    %v1086 = vpop.permute.xlu0 %1085
    %v1087 = vsel %vm201, %v1086, 0
    %1089 = vmatprep.subr.mxu0 0.0
    %1090 = vmatpush1.msra.mxu0 0.0
    %1091 = vmatprep.subr.mxu0 0.0
    %1092 = vmatpush1.msra.mxu0 0.0
    %1093 = vmatprep.subr.mxu0 0.0
    %1094 = vmatpush1.msra.mxu0 0.0
    %1095 = vmatprep.subr.mxu0 0.0
    %1096 = vmatpush1.msra.mxu0 0.0
    %1097 = vmatprep.subr.mxu0 0.0
    %1098 = vmatpush1.msra.mxu0 0.0
    %1099 = vmatprep.subr.mxu0 0.0
    %1100 = vmatpush1.msra.mxu0 0.0
    %1101 = vmatprep.subr.mxu0 0.0
    %1102 = vmatpush1.msra.mxu0 0.0
    %1103 = vmatprep.subr.mxu0 0.0
    %1104 = vmatpush1.msra.mxu0 0.0
    %1105 = vmatprep.subr.mxu0 0.0
    %1106 = vmatpush1.msra.mxu0 0.0
    %1107 = vmatprep.subr.mxu0 0.0
    %1108 = vmatpush1.msra.mxu0 0.0
    %1109 = vmatprep.subr.mxu0 0.0
    %1110 = vmatpush1.msra.mxu0 0.0
    %1111 = vmatprep.subr.mxu0 0.0
    %1112 = vmatpush1.msra.mxu0 0.0
    %1113 = vmatprep.subr.mxu0 0.0
    %1114 = vmatpush1.msra.mxu0 %v195
    %1115 = vmatprep.subr.mxu0 0.0
    %1116 = vmatpush1.msra.mxu0 %v194
    %1117 = vmatprep.subr.mxu0 0.0
    %1118 = vmatpush1.msra.mxu0 %v193
    %1119 = vmatprep.subr.mxu0 0.0
    %1120 = vmatpush1.msra.mxu0 %v192
    %1121 = vmatprep.subr.mxu0 0.0
    %1122 = vmatpush2.msra.mxu0 0.0
    %1123 = vmatprep.subr.mxu0 0.0
    %1124 = vmatpush2.msra.mxu0 0.0
    %1125 = vmatprep.subr.mxu0 0.0
    %1126 = vmatpush2.msra.mxu0 0.0
    %1127 = vmatprep.subr.mxu0 0.0
    %1128 = vmatpush2.msra.mxu0 0.0
    %1129 = vmatprep.subr.mxu0 0.0
    %1130 = vmatpush2.msra.mxu0 0.0
    %1131 = vmatprep.subr.mxu0 0.0
    %1132 = vmatpush2.msra.mxu0 0.0
    %1133 = vmatprep.subr.mxu0 0.0
    %1134 = vmatpush2.msra.mxu0 0.0
    %1135 = vmatprep.subr.mxu0 0.0
    %1136 = vmatpush2.msra.mxu0 0.0
    %1137 = vmatprep.subr.mxu0 0.0
    %1138 = vmatpush2.msra.mxu0 0.0
    %1139 = vmatprep.subr.mxu0 0.0
    %1140 = vmatpush2.msra.mxu0 0.0
    %1141 = vmatprep.subr.mxu0 0.0
    %1142 = vmatpush2.msra.mxu0 0.0
    %1143 = vmatprep.subr.mxu0 0.0
    %1144 = vmatpush2.msra.mxu0 0.0
    %1145 = vmatprep.subr.mxu0 0.0
    %1146 = vmatpush2.msra.mxu0 0.0
    %1147 = vmatprep.subr.mxu0 0.0
    %1148 = vmatpush2.msra.mxu0 0.0
    %1149 = vmatprep.subr.mxu0 0.0
    %1150 = vmatpush2.msra.mxu0 0.0
    %1151 = vmatprep.subr.mxu0 0.0
    %1152 = vmatpush2.msra.mxu0 0.0
    %1153 = vmatprep.mubr.f32.mxu0 0.0
    %1154 = vmatmul.mubr.f32.gmra.mxu0 %v1087
    %v1155 = vpop.f32.mrf.mxu0
    %v1156 = vadd.f32 0.0, %v1155
    %v1157 = vpop.f32.mrf.mxu0
    %1158 = vdwg.mxu0
    %v1159 = vadd.f32 %v328, %v1156
    %v1160 = vxor.u32 %v1159, 2147483648
    %v1161 = vmul.f32 %v1160, 1.442695
    %v1162 = vpow.pop %v1161
    %v1163 = vadd.f32 %v1162, 1.0
    %v1164 = vrcp.pop %v1163
    %v1165 = vmul.f32 1.0, %v1164
    %v1166 = vtanh.pop %v1159
    %v1167 = vmul.f32 %v1165, %v1070
    %1169 = vrot.lane.b32.xlu0 %v1166, 64
    %v1170 = vpop.permute.xlu0 %1169
    %v1172 = vmul.f32 %v1165, %v1170
    %1174 = vrot.lane.b32.xlu0 %v1172, 32
    %v1175 = vpop.permute.xlu0 %1174
    %v1177 = vadd.f32 %v1167, %v1175
    %v1178 = vtanh.pop %v1177
    %1180 = vrot.lane.b32.xlu0 %v1178, 64
    %v1181 = vpop.permute.xlu0 %1180
    %v1183 = vmul.f32 %v1165, %v1181
    %vm1184 = vcmp.eq.s32.totalorder %v336, 7
    %v1185 = vsel %vm1184, 1, 0
    %1186 = vset.pattern.permute.xlu0 0
    %1187 = vperm.xlu0 %1186, %v1185
    %v1188 = vpop.permute.xlu0 %1187
    %vm1189 = vcmp.eq.s32.totalorder %v1188, 1
    %v1190 = vsel %vm1189, %v1183, %v1083
    %v1191 = vld [vmem:[#allocation2 + $0x18] sm:$0xff]
    %v1192 = vld [vmem:[#allocation2 + $0x20] sm:$0xff]
    %v1193 = vld [vmem:[#allocation2 + $0x28] sm:$0xff]
    %v1194 = vld [vmem:[#allocation2 + $0x30] sm:$0xff]
    %v1195 = vld [vmem:[#allocation2 + $0x38] sm:$0x1]
    %v1196 = vlaneseq
    %v1197 = vshrl.u32 %v1196, 7
    %v1198 = vsub.s32 0, %v1197
    %v1199 = vrot.slane %v1195, %v1198
    %1201 = vrot.lane.b32.xlu0 %v1190, 32
    %v1202 = vpop.permute.xlu0 %1201
    %v1203 = vsel %vm201, %v1202, 0
    %1205 = vmatprep.subr.mxu0 0.0
    %1206 = vmatpush1.msra.mxu0 0.0
    %1207 = vmatprep.subr.mxu0 0.0
    %1208 = vmatpush1.msra.mxu0 0.0
    %1209 = vmatprep.subr.mxu0 0.0
    %1210 = vmatpush1.msra.mxu0 0.0
    %1211 = vmatprep.subr.mxu0 0.0
    %1212 = vmatpush1.msra.mxu0 0.0
    %1213 = vmatprep.subr.mxu0 0.0
    %1214 = vmatpush1.msra.mxu0 0.0
    %1215 = vmatprep.subr.mxu0 0.0
    %1216 = vmatpush1.msra.mxu0 0.0
    %1217 = vmatprep.subr.mxu0 0.0
    %1218 = vmatpush1.msra.mxu0 0.0
    %1219 = vmatprep.subr.mxu0 0.0
    %1220 = vmatpush1.msra.mxu0 0.0
    %1221 = vmatprep.subr.mxu0 0.0
    %1222 = vmatpush1.msra.mxu0 0.0
    %1223 = vmatprep.subr.mxu0 0.0
    %1224 = vmatpush1.msra.mxu0 0.0
    %1225 = vmatprep.subr.mxu0 0.0
    %1226 = vmatpush1.msra.mxu0 0.0
    %1227 = vmatprep.subr.mxu0 0.0
    %1228 = vmatpush1.msra.mxu0 0.0
    %1229 = vmatprep.subr.mxu0 0.0
    %1230 = vmatpush1.msra.mxu0 %v1194
    %1231 = vmatprep.subr.mxu0 0.0
    %1232 = vmatpush1.msra.mxu0 %v1193
    %1233 = vmatprep.subr.mxu0 0.0
    %1234 = vmatpush1.msra.mxu0 %v1192
    %1235 = vmatprep.subr.mxu0 0.0
    %1236 = vmatpush1.msra.mxu0 %v1191
    %1237 = vmatprep.subr.mxu0 0.0
    %1238 = vmatpush2.msra.mxu0 0.0
    %1239 = vmatprep.subr.mxu0 0.0
    %1240 = vmatpush2.msra.mxu0 0.0
    %1241 = vmatprep.subr.mxu0 0.0
    %1242 = vmatpush2.msra.mxu0 0.0
    %1243 = vmatprep.subr.mxu0 0.0
    %1244 = vmatpush2.msra.mxu0 0.0
    %1245 = vmatprep.subr.mxu0 0.0
    %1246 = vmatpush2.msra.mxu0 0.0
    %1247 = vmatprep.subr.mxu0 0.0
    %1248 = vmatpush2.msra.mxu0 0.0
    %1249 = vmatprep.subr.mxu0 0.0
    %1250 = vmatpush2.msra.mxu0 0.0
    %1251 = vmatprep.subr.mxu0 0.0
    %1252 = vmatpush2.msra.mxu0 0.0
    %1253 = vmatprep.subr.mxu0 0.0
    %1254 = vmatpush2.msra.mxu0 0.0
    %1255 = vmatprep.subr.mxu0 0.0
    %1256 = vmatpush2.msra.mxu0 0.0
    %1257 = vmatprep.subr.mxu0 0.0
    %1258 = vmatpush2.msra.mxu0 0.0
    %1259 = vmatprep.subr.mxu0 0.0
    %1260 = vmatpush2.msra.mxu0 0.0
    %1261 = vmatprep.subr.mxu0 0.0
    %1262 = vmatpush2.msra.mxu0 0.0
    %1263 = vmatprep.subr.mxu0 0.0
    %1264 = vmatpush2.msra.mxu0 0.0
    %1265 = vmatprep.subr.mxu0 0.0
    %1266 = vmatpush2.msra.mxu0 0.0
    %1267 = vmatprep.subr.mxu0 0.0
    %1268 = vmatpush2.msra.mxu0 0.0
    %1269 = vmatprep.mubr.f32.mxu0 0.0
    %1270 = vmatmul.mubr.f32.gmra.mxu0 %v1203
    %v1271 = vpop.f32.mrf.mxu0
    %v1272 = vadd.f32 %v1199, %v1271
    %v1273 = vpop.f32.mrf.mxu0
    %1274 = vdwg.mxu0
    %v1275 = vmax.f32 %v1272, 0.0
    %v1276 = vld [vmem:[#allocation2 + $0x40] sm:$0xff]
    %v1277 = vld [vmem:[#allocation2 + $0x48] sm:$0xff]
    %v1278 = vld [vmem:[#allocation2 + $0x50] sm:$0x1]
    %v1279 = vld [vmem:[%s1] sm:$0xff]
    %v1280 = vlaneseq
    %v1281 = vshrl.u32 %v1280, 7
    %v1282 = vsub.s32 0, %v1281
    %v1283 = vrot.slane %v1278, %v1282
    %v1285 = vsel %vm50, %v1279, 0
    %1287 = vmatprep.subr.mxu0 0.0
    %1288 = vmatpush1.msra.mxu0 0.0
    %1289 = vmatprep.subr.mxu0 0.0
    %1290 = vmatpush1.msra.mxu0 0.0
    %1291 = vmatprep.subr.mxu0 0.0
    %1292 = vmatpush1.msra.mxu0 0.0
    %1293 = vmatprep.subr.mxu0 0.0
    %1294 = vmatpush1.msra.mxu0 0.0
    %1295 = vmatprep.subr.mxu0 0.0
    %1296 = vmatpush1.msra.mxu0 0.0
    %1297 = vmatprep.subr.mxu0 0.0
    %1298 = vmatpush1.msra.mxu0 0.0
    %1299 = vmatprep.subr.mxu0 0.0
    %1300 = vmatpush1.msra.mxu0 0.0
    %1301 = vmatprep.subr.mxu0 0.0
    %1302 = vmatpush1.msra.mxu0 0.0
    %1303 = vmatprep.subr.mxu0 0.0
    %1304 = vmatpush1.msra.mxu0 0.0
    %1305 = vmatprep.subr.mxu0 0.0
    %1306 = vmatpush1.msra.mxu0 0.0
    %1307 = vmatprep.subr.mxu0 0.0
    %1308 = vmatpush1.msra.mxu0 0.0
    %1309 = vmatprep.subr.mxu0 0.0
    %1310 = vmatpush1.msra.mxu0 0.0
    %1311 = vmatprep.subr.mxu0 0.0
    %1312 = vmatpush1.msra.mxu0 0.0
    %1313 = vmatprep.subr.mxu0 0.0
    %1314 = vmatpush1.msra.mxu0 0.0
    %1315 = vmatprep.subr.mxu0 0.0
    %1316 = vmatpush1.msra.mxu0 %v1277
    %1317 = vmatprep.subr.mxu0 0.0
    %1318 = vmatpush1.msra.mxu0 %v1276
    %1319 = vmatprep.subr.mxu0 0.0
    %1320 = vmatpush2.msra.mxu0 0.0
    %1321 = vmatprep.subr.mxu0 0.0
    %1322 = vmatpush2.msra.mxu0 0.0
    %1323 = vmatprep.subr.mxu0 0.0
    %1324 = vmatpush2.msra.mxu0 0.0
    %1325 = vmatprep.subr.mxu0 0.0
    %1326 = vmatpush2.msra.mxu0 0.0
    %1327 = vmatprep.subr.mxu0 0.0
    %1328 = vmatpush2.msra.mxu0 0.0
    %1329 = vmatprep.subr.mxu0 0.0
    %1330 = vmatpush2.msra.mxu0 0.0
    %1331 = vmatprep.subr.mxu0 0.0
    %1332 = vmatpush2.msra.mxu0 0.0
    %1333 = vmatprep.subr.mxu0 0.0
    %1334 = vmatpush2.msra.mxu0 0.0
    %1335 = vmatprep.subr.mxu0 0.0
    %1336 = vmatpush2.msra.mxu0 0.0
    %1337 = vmatprep.subr.mxu0 0.0
    %1338 = vmatpush2.msra.mxu0 0.0
    %1339 = vmatprep.subr.mxu0 0.0
    %1340 = vmatpush2.msra.mxu0 0.0
    %1341 = vmatprep.subr.mxu0 0.0
    %1342 = vmatpush2.msra.mxu0 0.0
    %1343 = vmatprep.subr.mxu0 0.0
    %1344 = vmatpush2.msra.mxu0 0.0
    %1345 = vmatprep.subr.mxu0 0.0
    %1346 = vmatpush2.msra.mxu0 0.0
    %1347 = vmatprep.subr.mxu0 0.0
    %1348 = vmatpush2.msra.mxu0 0.0
    %1349 = vmatprep.subr.mxu0 0.0
    %1350 = vmatpush2.msra.mxu0 0.0
    %1351 = vmatprep.mubr.f32.mxu0 0.0
    %1352 = vmatmul.mubr.f32.gmra.mxu0 %v1285
    %v1353 = vpop.f32.mrf.mxu0
    %v1354 = vadd.f32 %v1283, %v1353
    %v1355 = vpop.f32.mrf.mxu0
    %1356 = vdwg.mxu0
    %v1357 = vmax.f32 %v1354, 0.0
    %v1358 = vld [vmem:[#allocation2 + $0x58] sm:$0xff]
    %v1359 = vld [vmem:[#allocation2 + $0x60] sm:$0xff]
    %v1360 = vld [vmem:[#allocation2 + $0x68] sm:$0xff]
    %v1361 = vld [vmem:[#allocation2 + $0x70] sm:$0xff]
    %v1362 = vld [vmem:[#allocation2 + $0x78] sm:$0xff]
    %v1363 = vld [vmem:[#allocation2 + $0x80] sm:$0xff]
    %v1364 = vld [vmem:[#allocation2 + $0x88] sm:$0xff]
    %v1365 = vld [vmem:[#allocation2 + $0x90] sm:$0xff]
    %v1366 = vld [vmem:[#allocation2 + $0x98] sm:$0x1]
    %v1368 = vsel %vm201, %v1357, 0
    %1370 = vmatprep.subr.mxu0 0.0
    %1371 = vmatpush1.msra.mxu0 0.0
    %1372 = vmatprep.subr.mxu0 0.0
    %1373 = vmatpush1.msra.mxu0 0.0
    %1374 = vmatprep.subr.mxu0 0.0
    %1375 = vmatpush1.msra.mxu0 0.0
    %1376 = vmatprep.subr.mxu0 0.0
    %1377 = vmatpush1.msra.mxu0 0.0
    %1378 = vmatprep.subr.mxu0 0.0
    %1379 = vmatpush1.msra.mxu0 0.0
    %1380 = vmatprep.subr.mxu0 0.0
    %1381 = vmatpush1.msra.mxu0 0.0
    %1382 = vmatprep.subr.mxu0 0.0
    %1383 = vmatpush1.msra.mxu0 0.0
    %1384 = vmatprep.subr.mxu0 0.0
    %1385 = vmatpush1.msra.mxu0 0.0
    %1386 = vmatprep.subr.mxu0 0.0
    %1387 = vmatpush1.msra.mxu0 0.0
    %1388 = vmatprep.subr.mxu0 0.0
    %1389 = vmatpush1.msra.mxu0 0.0
    %1390 = vmatprep.subr.mxu0 0.0
    %1391 = vmatpush1.msra.mxu0 0.0
    %1392 = vmatprep.subr.mxu0 0.0
    %1393 = vmatpush1.msra.mxu0 0.0
    %1394 = vmatprep.subr.mxu0 0.0
    %1395 = vmatpush1.msra.mxu0 %v1365
    %1396 = vmatprep.subr.mxu0 0.0
    %1397 = vmatpush1.msra.mxu0 %v1364
    %1398 = vmatprep.subr.mxu0 0.0
    %1399 = vmatpush1.msra.mxu0 %v1363
    %1400 = vmatprep.subr.mxu0 0.0
    %1401 = vmatpush1.msra.mxu0 %v1362
    %1402 = vmatprep.subr.mxu0 0.0
    %1403 = vmatpush2.msra.mxu0 0.0
    %1404 = vmatprep.subr.mxu0 0.0
    %1405 = vmatpush2.msra.mxu0 0.0
    %1406 = vmatprep.subr.mxu0 0.0
    %1407 = vmatpush2.msra.mxu0 0.0
    %1408 = vmatprep.subr.mxu0 0.0
    %1409 = vmatpush2.msra.mxu0 0.0
    %1410 = vmatprep.subr.mxu0 0.0
    %1411 = vmatpush2.msra.mxu0 0.0
    %1412 = vmatprep.subr.mxu0 0.0
    %1413 = vmatpush2.msra.mxu0 0.0
    %1414 = vmatprep.subr.mxu0 0.0
    %1415 = vmatpush2.msra.mxu0 0.0
    %1416 = vmatprep.subr.mxu0 0.0
    %1417 = vmatpush2.msra.mxu0 0.0
    %1418 = vmatprep.subr.mxu0 0.0
    %1419 = vmatpush2.msra.mxu0 0.0
    %1420 = vmatprep.subr.mxu0 0.0
    %1421 = vmatpush2.msra.mxu0 0.0
    %1422 = vmatprep.subr.mxu0 0.0
    %1423 = vmatpush2.msra.mxu0 0.0
    %1424 = vmatprep.subr.mxu0 0.0
    %1425 = vmatpush2.msra.mxu0 0.0
    %1426 = vmatprep.subr.mxu0 0.0
    %1427 = vmatpush2.msra.mxu0 0.0
    %1428 = vmatprep.subr.mxu0 0.0
    %1429 = vmatpush2.msra.mxu0 0.0
    %1430 = vmatprep.subr.mxu0 0.0
    %1431 = vmatpush2.msra.mxu0 0.0
    %1432 = vmatprep.subr.mxu0 0.0
    %1433 = vmatpush2.msra.mxu0 0.0
    %1434 = vmatprep.mubr.f32.mxu0 0.0
    %1435 = vmatmul.mubr.f32.gmra.mxu0 %v1368
    %v1436 = vpop.f32.mrf.mxu0
    %v1437 = vadd.f32 0.0, %v1436
    %v1438 = vpop.f32.mrf.mxu0
    %1439 = vdwg.mxu0
    %v1441 = vsel %vm201, %v1275, 0
    %1443 = vmatprep.subr.mxu0 0.0
    %1444 = vmatpush1.msra.mxu0 0.0
    %1445 = vmatprep.subr.mxu0 0.0
    %1446 = vmatpush1.msra.mxu0 0.0
    %1447 = vmatprep.subr.mxu0 0.0
    %1448 = vmatpush1.msra.mxu0 0.0
    %1449 = vmatprep.subr.mxu0 0.0
    %1450 = vmatpush1.msra.mxu0 0.0
    %1451 = vmatprep.subr.mxu0 0.0
    %1452 = vmatpush1.msra.mxu0 0.0
    %1453 = vmatprep.subr.mxu0 0.0
    %1454 = vmatpush1.msra.mxu0 0.0
    %1455 = vmatprep.subr.mxu0 0.0
    %1456 = vmatpush1.msra.mxu0 0.0
    %1457 = vmatprep.subr.mxu0 0.0
    %1458 = vmatpush1.msra.mxu0 0.0
    %1459 = vmatprep.subr.mxu0 0.0
    %1460 = vmatpush1.msra.mxu0 0.0
    %1461 = vmatprep.subr.mxu0 0.0
    %1462 = vmatpush1.msra.mxu0 0.0
    %1463 = vmatprep.subr.mxu0 0.0
    %1464 = vmatpush1.msra.mxu0 0.0
    %1465 = vmatprep.subr.mxu0 0.0
    %1466 = vmatpush1.msra.mxu0 0.0
    %1467 = vmatprep.subr.mxu0 0.0
    %1468 = vmatpush1.msra.mxu0 %v1361
    %1469 = vmatprep.subr.mxu0 0.0
    %1470 = vmatpush1.msra.mxu0 %v1360
    %1471 = vmatprep.subr.mxu0 0.0
    %1472 = vmatpush1.msra.mxu0 %v1359
    %1473 = vmatprep.subr.mxu0 0.0
    %1474 = vmatpush1.msra.mxu0 %v1358
    %1475 = vmatprep.subr.mxu0 0.0
    %1476 = vmatpush2.msra.mxu0 0.0
    %1477 = vmatprep.subr.mxu0 0.0
    %1478 = vmatpush2.msra.mxu0 0.0
    %1479 = vmatprep.subr.mxu0 0.0
    %1480 = vmatpush2.msra.mxu0 0.0
    %1481 = vmatprep.subr.mxu0 0.0
    %1482 = vmatpush2.msra.mxu0 0.0
    %1483 = vmatprep.subr.mxu0 0.0
    %1484 = vmatpush2.msra.mxu0 0.0
    %1485 = vmatprep.subr.mxu0 0.0
    %1486 = vmatpush2.msra.mxu0 0.0
    %1487 = vmatprep.subr.mxu0 0.0
    %1488 = vmatpush2.msra.mxu0 0.0
    %1489 = vmatprep.subr.mxu0 0.0
    %1490 = vmatpush2.msra.mxu0 0.0
    %1491 = vmatprep.subr.mxu0 0.0
    %1492 = vmatpush2.msra.mxu0 0.0
    %1493 = vmatprep.subr.mxu0 0.0
    %1494 = vmatpush2.msra.mxu0 0.0
    %1495 = vmatprep.subr.mxu0 0.0
    %1496 = vmatpush2.msra.mxu0 0.0
    %1497 = vmatprep.subr.mxu0 0.0
    %1498 = vmatpush2.msra.mxu0 0.0
    %1499 = vmatprep.subr.mxu0 0.0
    %1500 = vmatpush2.msra.mxu0 0.0
    %1501 = vmatprep.subr.mxu0 0.0
    %1502 = vmatpush2.msra.mxu0 0.0
    %1503 = vmatprep.subr.mxu0 0.0
    %1504 = vmatpush2.msra.mxu0 0.0
    %1505 = vmatprep.subr.mxu0 0.0
    %1506 = vmatpush2.msra.mxu0 0.0
    %1507 = vmatprep.mubr.f32.mxu0 0.0
    %1508 = vmatmul.mubr.f32.gmra.mxu0 %v1441
    %v1509 = vpop.f32.mrf.mxu0
    %v1510 = vadd.f32 %v1437, %v1509
    %v1511 = vpop.f32.mrf.mxu0
    %1512 = vdwg.mxu0
    %v1513 = vlaneseq
    %v1514 = vshrl.u32 %v1513, 7
    %v1515 = vsub.s32 0, %v1514
    %v1516 = vrot.slane %v1366, %v1515
    %v1517 = vadd.f32 %v1510, %v1516
    %v1518 = vmax.f32 %v1517, 0.0
    %v1519 = vld [vmem:[#allocation2 + $0xa0] sm:$0x1]
    %v1520 = vld [vmem:[#allocation2 + $0xa8] sm:$0x1]
    %v1521 = vlaneseq
    %v1522 = vshrl.u32 %v1521, 7
    %v1523 = vsub.s32 0, %v1522
    %v1524 = vrot.slane %v1519, %v1523
    %v1525 = vmul.f32 %v1518, %v1524
    %v1526 = vsel %vm201, %v1525, 0.0
    %1527 = vadd.xlane.f32.xlu0 %v1526
    %v1528 = vpop.xlane.xlu0 %1527
    %v1529 = vlaneseq
    %v1530 = vshrl.u32 %v1529, 7
    %v1531 = vsub.s32 0, %v1530
    %v1532 = vrot.slane %v1520, %v1531
    %v1533 = vadd.f32 %v1528, %v1532
    %v1534 = vlaneseq
    %v1535 = vand.u32 %v1534, 127
    %vm1536 = vcmp.lt.s32.totalorder %v1535, 32
    %1538 = vset.pattern.permute.xlu0 0
    %1539 = vperm.xlu0 %1538, %v1533
    %v1540 = vpop.permute.xlu0 %1539
    %v1542 = vsel %vm1536, %v1275, %v1540
    %1543 = vst [vmem:[#allocation5] sm:$0xff] %v1542
    // Predicated region
    $region26: #{tpu_custom_call.1} parent=1 // pred_check
      _
    $region27: #{tpu_custom_call.1} parent=1 // pred_check_branch
      %1545 = sbr.rel (0) target = $region29
    $region28: #{tpu_custom_call.1} parent=1 // pred_region
      %s1547 = ssub.s32 128, 128
      %1548 = vsyncadd [#allocation4], %s1547
      %s1550 = sshll.u32 [#allocation5], 4
      %s1551 = int_to_ptr.vmem [resolvable:$true] %s1550
      %1553 = dma.vmem_to_hbm [thread:$0]  %s1551, 128, %s5, [#allocation4]
    $region29: #{tpu_custom_call.1} parent=1 // pred_fallthru
      _
    // Predicated region
    $region30: #{tpu_custom_call.1} parent=1 // pred_check
      _
    $region31: #{tpu_custom_call.1} parent=1 // pred_check_branch
      %1555 = sbr.rel (0) target = $region33
    $region32: #{tpu_custom_call.1} parent=1 // pred_region
      %1556 = dma.done [#allocation4], 128
    $region33: #{tpu_custom_call.1} parent=1 // pred_fallthru
      _
    %1557 = vsyncpa [#allocation3], 1
    %1558 = vsyncpa [#allocation4], 1

</llo_original>
